<compile_context>
chip_gen: v6e
topology: v6e:2x2x1
jax: 0.10.0
libtpu: 0.0.40
codegen_flags: <defaults>
</compile_context>

<pallas_src>
import functools

import jax
import jax.numpy as jnp
from jax import lax
from jax.experimental import pallas as pl
from jax.experimental.pallas import tpu as pltpu


# ----------------------------- fused Pallas kernel -----------------------------

def _fsmn_kernel(*refs, BB, T, H, lf, rf, ld, rd, has_hidden):
    """One BB-sized batch block per grid step. Ref order:
       x, w_in, b_in, [w_left], [w_right], w_out, b_out, [hidden], out, p_out, pad."""
    i = 0
    x_ref = refs[i]; i += 1
    w_in_ref = refs[i]; i += 1
    b_in_ref = refs[i]; i += 1
    w_left_ref = None
    w_right_ref = None
    if lf > 0:
        w_left_ref = refs[i]; i += 1
    if rf > 0:
        w_right_ref = refs[i]; i += 1
    w_out_ref = refs[i]; i += 1
    b_out_ref = refs[i]; i += 1
    hidden_ref = None
    if has_hidden:
        hidden_ref = refs[i]; i += 1
    out_ref = refs[i]; i += 1
    pout_ref = refs[i]; i += 1
    pad_ref = refs[i]; i += 1            # VMEM scratch (BB, pad_l + T + pad_r, H) f32

    pad_l = lf * ld
    pad_r = rf * rd
    M = BB * T
    f32 = jnp.float32

    # conv_in: 1x1 conv over channels == one tall matmul on the MXU.
    # Operands keep their native dtype (bf16 stays bf16); accumulation is f32.
    x = x_ref[...].reshape(M, x_ref.shape[-1])
    p_in = jnp.dot(x, w_in_ref[...], preferred_element_type=f32)
    p_in = p_in + b_in_ref[...].astype(f32)
    p_in3 = p_in.reshape(BB, T, H)

    # Zero-padded scratch for the time-shift taps.  Halo rows are zeroed every
    # step (scratch is per-core; the parallel grid may be sharded across cores),
    # then p_in is written once into the middle.
    if lf > 0 or rf > 0:
        if pad_l > 0:
            pad_ref[:, :pad_l, :] = jnp.zeros((BB, pad_l, H), f32)
        if pad_r > 0:
            pad_ref[:, pad_l + T:, :] = jnp.zeros((BB, pad_r, H), f32)
        pad_ref[:, pad_l:pad_l + T, :] = p_in3

    acc = p_in3                                                   # p_in term of p_out

    # Left (causal) taps: offsets -(lf-k)*ld, k = 0..lf.  Each tap is one
    # contiguous static-slice load from the padded scratch + multiply-add.
    if lf > 0:
        for k in range(lf + 1):
            off = (lf - k) * ld
            tap = p_in3 if off == 0 else pad_ref[:, pad_l - off:pad_l - off + T, :]
            acc = acc + tap * w_left_ref[k]                       # (H,) row broadcast

    # Right (look-ahead) taps: offsets +k*rd, k = 1..rf.
    if rf > 0:
        for k in range(1, rf + 1):
            off = k * rd
            acc = acc + pad_ref[:, pad_l + off:pad_l + off + T, :] * w_right_ref[k - 1]

    # Optional hidden accumulation.  hidden arrives channels-first (BB, H, T);
    # transpose per batch row on the XLU (reusing the scratch mid-region as
    # staging) so the wrapper never does an HBM transpose pass.
    if has_hidden:
        for b in range(BB):
            pad_ref[b, pad_l:pad_l + T, :] = hidden_ref[b].T.astype(f32)
        acc = acc + pad_ref[:, pad_l:pad_l + T, :]

    # p_out is returned channels-first (module convention), kept in f32.
    for b in range(BB):
        pout_ref[b] = acc[b].T.astype(pout_ref.dtype)

    # conv_out (1x1 conv == matmul) + ReLU; acc cast to the weight dtype so bf16
    # weights keep the MXU in bf16 mode, accumulation stays f32.
    y = jnp.dot(acc.reshape(M, H).astype(w_out_ref.dtype), w_out_ref[...],
                preferred_element_type=f32)
    y = jnp.maximum(y + b_out_ref[...].astype(f32), 0.0)
    out_ref[...] = y.reshape(BB, T, out_ref.shape[-1]).astype(out_ref.dtype)


def _pick_batch_block(B, T, row_bytes, target_rows=256, vmem_budget=24 * 1024 * 1024):
    """Divisor of B used as the per-grid-step batch block:
       - BB*T ~ target_rows so the MXU sees a tall M panel,
       - keep >= 2 grid steps when possible (pipelining / both v7x TCs),
       - per-step streamed VMEM footprint stays under vmem_budget (v7x-safe)."""
    divisors = [d for d in range(1, B + 1) if B % d == 0]
    want = max(1, target_rows // max(T, 1))
    fit = [d for d in divisors if d <= want and d * T * row_bytes <= vmem_budget]
    bb = fit[-1] if fit else 1
    if B // bb < 2 and bb > 1:
        smaller = [d for d in divisors if d < bb]
        if smaller:
            bb = smaller[-1]
    return bb


def fsmn_forward(params, x, hidden=None, *, left_frame=1, right_frame=1,
                 left_dilation=1, right_dilation=1, batch_block=None):
    """FsmnLayer.forward.  x: (B, T, input_dim); hidden: optional (B, hidden_dim, T).
    Returns (out (B, T, out_dim), p_out (B, hidden_dim, T)) -- module convention;
    p_out is float32."""
    B, T, Din = x.shape
    H = params["w_in"].shape[1]
    Dout = params["w_out"].shape[1]
    has_hidden = hidden is not None
    pad_l = left_frame * left_dilation
    pad_r = right_frame * right_dilation

    itm = jnp.dtype(x.dtype).itemsize
    h_itm = jnp.dtype(hidden.dtype).itemsize if has_hidden else 0
    # bytes per time row of streamed, double-buffered blocks + tap scratch
    row_bytes = 2 * (Din * itm + Dout * itm + H * 4 + H * h_itm) + H * 4
    BB = batch_block if batch_block is not None else _pick_batch_block(B, T, row_bytes)
    assert B % BB == 0, f"batch_block={BB} must divide B={B}"
    nb = B // BB

    inputs = [x, params["w_in"], params["b_in"]]
    in_specs = [
        pl.BlockSpec((BB, T, Din), lambda b: (b, 0, 0)),
        pl.BlockSpec((Din, H), lambda b: (0, 0)),       # weights: constant index map,
        pl.BlockSpec((1, H), lambda b: (0, 0)),         # resident across grid steps
    ]
    if left_frame > 0:
        inputs.append(params["w_left"])
        in_specs.append(pl.BlockSpec((left_frame + 1, H), lambda b: (0, 0)))
    if right_frame > 0:
        inputs.append(params["w_right"])
        in_specs.append(pl.BlockSpec((right_frame, H), lambda b: (0, 0)))
    inputs += [params["w_out"], params["b_out"]]
    in_specs += [
        pl.BlockSpec((H, Dout), lambda b: (0, 0)),
        pl.BlockSpec((1, Dout), lambda b: (0, 0)),
    ]
    if has_hidden:
        inputs.append(hidden)                           # channels-first, transposed in-kernel
        in_specs.append(pl.BlockSpec((BB, H, T), lambda b: (b, 0, 0)))

    kernel = functools.partial(
        _fsmn_kernel, BB=BB, T=T, H=H, lf=left_frame, rf=right_frame,
        ld=left_dilation, rd=right_dilation, has_hidden=has_hidden)

    taps = (left_frame + 1 if left_frame > 0 else 0) + right_frame
    flops = (2 * B * T * (Din * H + H * Dout)
             + 2 * B * T * H * (taps + (1 if has_hidden else 0)))
    w_bytes = sum(int(params[k].size) * jnp.dtype(params[k].dtype).itemsize
                  for k in params)
    bytes_accessed = (x.size * itm + w_bytes
                      + B * T * Dout * itm          # out write
                      + B * T * H * 4               # p_out write (always)
                      + (hidden.size * h_itm if has_hidden else 0))

    out, p_out = pl.pallas_call(
        kernel,
        grid=(nb,),
        in_specs=in_specs,
        out_specs=[
            pl.BlockSpec((BB, T, Dout), lambda b: (b, 0, 0)),
            pl.BlockSpec((BB, H, T), lambda b: (b, 0, 0)),
        ],
        out_shape=[
            jax.ShapeDtypeStruct((B, T, Dout), x.dtype),
            jax.ShapeDtypeStruct((B, H, T), jnp.float32),
        ],
        scratch_shapes=[pltpu.VMEM((BB, pad_l + T + pad_r, H), jnp.float32)],
        compiler_params=pltpu.CompilerParams(dimension_semantics=("parallel",)),
        cost_estimate=pl.CostEstimate(flops=flops, transcendentals=0,
                                      bytes_accessed=bytes_accessed),
    )(*inputs)
    return out, p_out


# ----------------------------- parameter init -----------------------------

def init_params(key, din, h, dout, lf, rf):
    ks = jax.random.split(key, 6)
    p = {}
    p["w_in"] = jax.random.normal(ks[0], (din, h), jnp.float32) / (din ** 0.5)
    p["b_in"] = 0.1 * jax.random.normal(ks[1], (1, h), jnp.float32)
    if lf > 0:
        # row k of w_left corresponds to conv_left.weight[:, 0, k]
        p["w_left"] = jax.random.normal(ks[2], (lf + 1, h), jnp.float32) / ((lf + 1) ** 0.5)
    if rf > 0:
        p["w_right"] = jax.random.normal(ks[3], (rf, h), jnp.float32) / (rf ** 0.5)
    p["w_out"] = jax.random.normal(ks[4], (h, dout), jnp.float32) / (h ** 0.5)
    p["b_out"] = 0.1 * jax.random.normal(ks[5], (1, dout), jnp.float32)
    return p


# ----------------------------- pure-JAX reference -----------------------------

_mm = functools.partial(jnp.matmul, precision=lax.Precision.HIGHEST)


def reference_forward(params, x, hidden, lf, rf, ld, rd):
    """Mirrors the PyTorch module exactly (pad + depthwise dilated conv)."""
    B, T, Din = x.shape
    H = params["w_in"].shape[1]
    p_in = _mm(x, params["w_in"]) + params["b_in"]                    # (B, T, H)
    p_in_cf = jnp.transpose(p_in, (0, 2, 1))                          # (B, H, T)

    p_left = jnp.zeros_like(p_in_cf)
    if lf > 0:
        padded = jnp.pad(p_in_cf, ((0, 0), (0, 0), (ld * lf, 0)))
        w = jnp.transpose(params["w_left"])[:, None, :]               # (H, 1, lf+1)
        p_left = lax.conv_general_dilated(
            padded, w, window_strides=(1,), padding="VALID",
            rhs_dilation=(ld,), dimension_numbers=("NCH", "OIH", "NCH"),
            feature_group_count=H, precision=lax.Precision.HIGHEST)

    p_right = jnp.zeros_like(p_in_cf)
    if rf > 0:
        cropped = p_in_cf[:, :, rd:]                                  # negative left pad
        padded = jnp.pad(cropped, ((0, 0), (0, 0), (0, rd * rf)))
        w = jnp.transpose(params["w_right"])[:, None, :]              # (H, 1, rf)
        p_right = lax.conv_general_dilated(
            padded, w, window_strides=(1,), padding="VALID",
            rhs_dilation=(rd,), dimension_numbers=("NCH", "OIH", "NCH"),
            feature_group_count=H, precision=lax.Precision.HIGHEST)

    p_out = p_in_cf + p_left + p_right
    if hidden is not None:
        p_out = hidden.astype(p_out.dtype) + p_out
    out = jnp.maximum(_mm(jnp.transpose(p_out, (0, 2, 1)), params["w_out"])
                      + params["b_out"], 0.0)
    return out, p_out


# ----------------------------- main -----------------------------

if __name__ == "__main__":
    # Lane-dense channel dims (multiples of 128) so matmuls and all output
    # stores are unmasked; B*T folds into a 256-row MXU panel per grid step.
    B, T, DIN, H, DOUT = 4, 128, 128, 128, 128
    LF, RF, LD, RD = 2, 1, 1, 2          # left/right frames and dilations

    key = jax.random.PRNGKey(0)
    kx, kp, kh = jax.random.split(key, 3)
    x = jax.random.normal(kx, (B, T, DIN), jnp.float32)
    params = init_params(kp, DIN, H, DOUT, LF, RF)

    # 1) hidden=None path (module default).
    out, p_out = fsmn_forward(params, x, hidden=None,
                              left_frame=LF, right_frame=RF,
                              left_dilation=LD, right_dilation=RD)
    jax.block_until_ready((out, p_out))
    assert out.shape == (B, T, DOUT) and out.dtype == jnp.float32
    assert p_out.shape == (B, H, T) and p_out.dtype == jnp.float32
    assert bool(jnp.all(jnp.isfinite(out))) and bool(jnp.all(jnp.isfinite(p_out)))

    ref_out, ref_pout = reference_forward(params, x, None, LF, RF, LD, RD)
    assert jnp.allclose(out, ref_out, atol=1e-2, rtol=1e-2), \
        f"out max abs err = {float(jnp.max(jnp.abs(out - ref_out)))}"
    assert jnp.allclose(p_out, ref_pout, atol=1e-2, rtol=1e-2), \
        f"p_out max abs err = {float(jnp.max(jnp.abs(p_out - ref_pout)))}"

    # 2) hidden accumulation path (hidden is channels-first (B, H, T) as in the module).
    hidden = jax.random.normal(kh, (B, H, T), jnp.float32)
    out_h, p_out_h = fsmn_forward(params, x, hidden=hidden,
                                  left_frame=LF, right_frame=RF,
                                  left_dilation=LD, right_dilation=RD)
    jax.block_until_ready((out_h, p_out_h))
    ref_out_h, ref_pout_h = reference_forward(params, x, hidden, LF, RF, LD, RD)
    assert jnp.allclose(out_h, ref_out_h, atol=1e-2, rtol=1e-2), \
        f"out(hidden) max abs err = {float(jnp.max(jnp.abs(out_h - ref_out_h)))}"
    assert jnp.allclose(p_out_h, ref_pout_h, atol=1e-2, rtol=1e-2), \
        f"p_out(hidden) max abs err = {float(jnp.max(jnp.abs(p_out_h - ref_pout_h)))}"

    # 3) bf16 activations + weights: MXU runs in bf16 with f32 accumulation.
    xb = x.astype(jnp.bfloat16)
    pb = jax.tree_util.tree_map(lambda a: a.astype(jnp.bfloat16), params)
    out_b, p_out_b = fsmn_forward(pb, xb, hidden=None,
                                  left_frame=LF, right_frame=RF,
                                  left_dilation=LD, right_dilation=RD)
    jax.block_until_ready((out_b, p_out_b))
    assert out_b.dtype == jnp.bfloat16 and p_out_b.dtype == jnp.float32
    pb32 = jax.tree_util.tree_map(lambda a: a.astype(jnp.float32), pb)
    ref_out_b, ref_pout_b = reference_forward(pb32, xb.astype(jnp.float32),
                                              None, LF, RF, LD, RD)
    assert jnp.allclose(out_b.astype(jnp.float32), ref_out_b, atol=0.15, rtol=0.05), \
        f"bf16 out max abs err = {float(jnp.max(jnp.abs(out_b.astype(jnp.float32) - ref_out_b)))}"
    assert jnp.allclose(p_out_b, ref_pout_b, atol=0.05, rtol=0.05), \
        f"bf16 p_out max abs err = {float(jnp.max(jnp.abs(p_out_b - ref_pout_b)))}"

    print("KERNEL_OK")
</pallas_src>

<mosaic_0001>
module attributes {stable_mosaic.version = 11 : i64} {
  func.func @_fsmn_kernel(%arg0: i32, %arg1: memref<2x128x128xf32, #tpu.memory_space<vmem>>, %arg2: memref<128x128xf32, #tpu.memory_space<vmem>>, %arg3: memref<1x128xf32, #tpu.memory_space<vmem>>, %arg4: memref<3x128xf32, #tpu.memory_space<vmem>>, %arg5: memref<1x128xf32, #tpu.memory_space<vmem>>, %arg6: memref<128x128xf32, #tpu.memory_space<vmem>>, %arg7: memref<1x128xf32, #tpu.memory_space<vmem>>, %arg8: memref<2x128x128xf32, #tpu.memory_space<vmem>>, %arg9: memref<2x128x128xf32, #tpu.memory_space<vmem>>, %arg10: memref<2x132x128xf32, #tpu.memory_space<vmem>>) attributes {dimension_semantics = [#tpu.dimension_semantics<parallel>], iteration_bounds = array<i64: 2>, scalar_prefetch = 0 : i64, scratch_operands = 1 : i64, tpu.core_type = #tpu.core_type<tc>, window_params = [{transform_indices = @transform_0, window_bounds = array<i64: 2, 128, 128>}, {pipeline_mode = #tpu.pipeline_mode<synchronous>, transform_indices = @transform_1, window_bounds = array<i64: 128, 128>}, {pipeline_mode = #tpu.pipeline_mode<synchronous>, transform_indices = @transform_2, window_bounds = array<i64: 1, 128>}, {pipeline_mode = #tpu.pipeline_mode<synchronous>, transform_indices = @transform_3, window_bounds = array<i64: 3, 128>}, {pipeline_mode = #tpu.pipeline_mode<synchronous>, transform_indices = @transform_4, window_bounds = array<i64: 1, 128>}, {pipeline_mode = #tpu.pipeline_mode<synchronous>, transform_indices = @transform_5, window_bounds = array<i64: 128, 128>}, {pipeline_mode = #tpu.pipeline_mode<synchronous>, transform_indices = @transform_6, window_bounds = array<i64: 1, 128>}, {transform_indices = @transform_7, window_bounds = array<i64: 2, 128, 128>}, {transform_indices = @transform_8, window_bounds = array<i64: 2, 128, 128>}]} {
    %c0 = arith.constant 0 : index
    %c0_0 = arith.constant 0 : index
    %c0_1 = arith.constant 0 : index
    %0 = vector.load %arg1[%c0, %c0_0, %c0_1] : memref<2x128x128xf32, #tpu.memory_space<vmem>>, vector<2x128x128xf32>
    %1 = vector.shape_cast %0 : vector<2x128x128xf32> to vector<256x128xf32>
    %c0_2 = arith.constant 0 : index
    %c0_3 = arith.constant 0 : index
    %2 = vector.load %arg2[%c0_2, %c0_3] : memref<128x128xf32, #tpu.memory_space<vmem>>, vector<128x128xf32>
    %cst = arith.constant dense<0.000000e+00> : vector<256x128xf32>
    %3 = tpu.matmul %1, %2, %cst {dimension_numbers = #tpu.dot_dimension_numbers<[1], [0], [0], [1], [0, 0, 1, 1], [], []>} : vector<256x128xf32>, vector<128x128xf32>, vector<256x128xf32> -> vector<256x128xf32>
    %c0_4 = arith.constant 0 : index
    %c0_5 = arith.constant 0 : index
    %4 = vector.load %arg3[%c0_4, %c0_5] : memref<1x128xf32, #tpu.memory_space<vmem>>, vector<1x128xf32>
    %5 = vector.broadcast %4 : vector<1x128xf32> to vector<256x128xf32>
    %6 = arith.addf %3, %5 : vector<256x128xf32>
    %7 = vector.shape_cast %6 : vector<256x128xf32> to vector<2x128x128xf32>
    %cst_6 = arith.constant 0.000000e+00 : f32
    %8 = vector.broadcast %cst_6 : f32 to vector<2x2x128xf32>
    %c0_7 = arith.constant 0 : index
    %c0_8 = arith.constant 0 : index
    %c0_9 = arith.constant 0 : index
    %9 = vector.load %arg10[%c0_7, %c0_8, %c0_9] : memref<2x132x128xf32, #tpu.memory_space<vmem>>, vector<2x2x128xf32>
    tpu.vector_store %arg10[%c0_7, %c0_8, %c0_9], %8 {strides = array<i32>} : memref<2x132x128xf32, #tpu.memory_space<vmem>>, vector<2x2x128xf32>,
    %cst_10 = arith.constant 0.000000e+00 : f32
    %10 = vector.broadcast %cst_10 : f32 to vector<2x2x128xf32>
    %c0_11 = arith.constant 0 : index
    %c130 = arith.constant 130 : index
    %c0_12 = arith.constant 0 : index
    %11 = vector.load %arg10[%c0_11, %c130, %c0_12] : memref<2x132x128xf32, #tpu.memory_space<vmem>>, vector<2x2x128xf32>
    tpu.vector_store %arg10[%c0_11, %c130, %c0_12], %10 {strides = array<i32>} : memref<2x132x128xf32, #tpu.memory_space<vmem>>, vector<2x2x128xf32>,
    %c0_13 = arith.constant 0 : index
    %c2 = arith.constant 2 : index
    %c0_14 = arith.constant 0 : index
    %12 = vector.load %arg10[%c0_13, %c2, %c0_14] : memref<2x132x128xf32, #tpu.memory_space<vmem>>, vector<2x128x128xf32>
    tpu.vector_store %arg10[%c0_13, %c2, %c0_14], %7 {strides = array<i32>} : memref<2x132x128xf32, #tpu.memory_space<vmem>>, vector<2x128x128xf32>,
    %c0_15 = arith.constant 0 : index
    %c0_16 = arith.constant 0 : index
    %c0_17 = arith.constant 0 : index
    %13 = vector.load %arg10[%c0_15, %c0_16, %c0_17] : memref<2x132x128xf32, #tpu.memory_space<vmem>>, vector<2x128x128xf32>
    %c0_18 = arith.constant 0 : index
    %c0_19 = arith.constant 0 : index
    %14 = vector.load %arg4[%c0_18, %c0_19] : memref<3x128xf32, #tpu.memory_space<vmem>>, vector<1x128xf32>
    %15 = vector.shape_cast %14 : vector<1x128xf32> to vector<128xf32>
    %16 = vector.shape_cast %15 : vector<128xf32> to vector<1x1x128xf32>
    %17 = vector.broadcast %16 : vector<1x1x128xf32> to vector<2x128x128xf32>
    %18 = arith.mulf %13, %17 : vector<2x128x128xf32>
    %19 = arith.addf %7, %18 : vector<2x128x128xf32>
    %c0_20 = arith.constant 0 : index
    %c1 = arith.constant 1 : index
    %c0_21 = arith.constant 0 : index
    %20 = vector.load %arg10[%c0_20, %c1, %c0_21] : memref<2x132x128xf32, #tpu.memory_space<vmem>>, vector<2x128x128xf32>
    %c1_22 = arith.constant 1 : index
    %c0_23 = arith.constant 0 : index
    %21 = vector.load %arg4[%c1_22, %c0_23] : memref<3x128xf32, #tpu.memory_space<vmem>>, vector<1x128xf32>
    %22 = vector.shape_cast %21 : vector<1x128xf32> to vector<128xf32>
    %23 = vector.shape_cast %22 : vector<128xf32> to vector<1x1x128xf32>
    %24 = vector.broadcast %23 : vector<1x1x128xf32> to vector<2x128x128xf32>
    %25 = arith.mulf %20, %24 : vector<2x128x128xf32>
    %26 = arith.addf %19, %25 : vector<2x128x128xf32>
    %c2_24 = arith.constant 2 : index
    %c0_25 = arith.constant 0 : index
    %27 = vector.load %arg4[%c2_24, %c0_25] : memref<3x128xf32, #tpu.memory_space<vmem>>, vector<1x128xf32>
    %28 = vector.shape_cast %27 : vector<1x128xf32> to vector<128xf32>
    %29 = vector.shape_cast %28 : vector<128xf32> to vector<1x1x128xf32>
    %30 = vector.broadcast %29 : vector<1x1x128xf32> to vector<2x128x128xf32>
    %31 = arith.mulf %7, %30 : vector<2x128x128xf32>
    %32 = arith.addf %26, %31 : vector<2x128x128xf32>
    %c0_26 = arith.constant 0 : index
    %c4 = arith.constant 4 : index
    %c0_27 = arith.constant 0 : index
    %33 = vector.load %arg10[%c0_26, %c4, %c0_27] : memref<2x132x128xf32, #tpu.memory_space<vmem>>, vector<2x128x128xf32>
    %c0_28 = arith.constant 0 : index
    %c0_29 = arith.constant 0 : index
    %34 = vector.load %arg5[%c0_28, %c0_29] : memref<1x128xf32, #tpu.memory_space<vmem>>, vector<1x128xf32>
    %35 = vector.shape_cast %34 : vector<1x128xf32> to vector<128xf32>
    %36 = vector.shape_cast %35 : vector<128xf32> to vector<1x1x128xf32>
    %37 = vector.broadcast %36 : vector<1x1x128xf32> to vector<2x128x128xf32>
    %38 = arith.mulf %33, %37 : vector<2x128x128xf32>
    %39 = arith.addf %32, %38 : vector<2x128x128xf32>
    %40 = vector.extract_strided_slice %39 {offsets = [0, 0, 0], sizes = [1, 128, 128], strides = [1, 1, 1]} : vector<2x128x128xf32> to vector<1x128x128xf32>
    %41 = vector.shape_cast %40 : vector<1x128x128xf32> to vector<128x128xf32>
    %42 = tpu.transpose %41, [1, 0] : vector<128x128xf32> -> vector<128x128xf32>
    %c0_30 = arith.constant 0 : index
    %c0_31 = arith.constant 0 : index
    %c0_32 = arith.constant 0 : index
    %43 = vector.load %arg9[%c0_30, %c0_31, %c0_32] : memref<2x128x128xf32, #tpu.memory_space<vmem>>, vector<1x128x128xf32>
    %44 = vector.shape_cast %43 : vector<1x128x128xf32> to vector<128x128xf32>
    %45 = vector.shape_cast %42 : vector<128x128xf32> to vector<1x128x128xf32>
    tpu.vector_store %arg9[%c0_30, %c0_31, %c0_32], %45 {strides = array<i32>} : memref<2x128x128xf32, #tpu.memory_space<vmem>>, vector<1x128x128xf32>,
    %46 = vector.extract_strided_slice %39 {offsets = [1, 0, 0], sizes = [1, 128, 128], strides = [1, 1, 1]} : vector<2x128x128xf32> to vector<1x128x128xf32>
    %47 = vector.shape_cast %46 : vector<1x128x128xf32> to vector<128x128xf32>
    %48 = tpu.transpose %47, [1, 0] : vector<128x128xf32> -> vector<128x128xf32>
    %c1_33 = arith.constant 1 : index
    %c0_34 = arith.constant 0 : index
    %c0_35 = arith.constant 0 : index
    %49 = vector.load %arg9[%c1_33, %c0_34, %c0_35] : memref<2x128x128xf32, #tpu.memory_space<vmem>>, vector<1x128x128xf32>
    %50 = vector.shape_cast %49 : vector<1x128x128xf32> to vector<128x128xf32>
    %51 = vector.shape_cast %48 : vector<128x128xf32> to vector<1x128x128xf32>
    tpu.vector_store %arg9[%c1_33, %c0_34, %c0_35], %51 {strides = array<i32>} : memref<2x128x128xf32, #tpu.memory_space<vmem>>, vector<1x128x128xf32>,
    %52 = vector.shape_cast %39 : vector<2x128x128xf32> to vector<256x128xf32>
    %c0_36 = arith.constant 0 : index
    %c0_37 = arith.constant 0 : index
    %53 = vector.load %arg6[%c0_36, %c0_37] : memref<128x128xf32, #tpu.memory_space<vmem>>, vector<128x128xf32>
    %cst_38 = arith.constant dense<0.000000e+00> : vector<256x128xf32>
    %54 = tpu.matmul %52, %53, %cst_38 {dimension_numbers = #tpu.dot_dimension_numbers<[1], [0], [0], [1], [0, 0, 1, 1], [], []>} : vector<256x128xf32>, vector<128x128xf32>, vector<256x128xf32> -> vector<256x128xf32>
    %c0_39 = arith.constant 0 : index
    %c0_40 = arith.constant 0 : index
    %55 = vector.load %arg7[%c0_39, %c0_40] : memref<1x128xf32, #tpu.memory_space<vmem>>, vector<1x128xf32>
    %56 = vector.broadcast %55 : vector<1x128xf32> to vector<256x128xf32>
    %57 = arith.addf %54, %56 : vector<256x128xf32>
    %cst_41 = arith.constant 0.000000e+00 : f32
    %58 = vector.broadcast %cst_41 : f32 to vector<256x128xf32>
    %59 = arith.maximumf %57, %58 : vector<256x128xf32>
    %60 = vector.shape_cast %59 : vector<256x128xf32> to vector<2x128x128xf32>
    %c0_42 = arith.constant 0 : index
    %c0_43 = arith.constant 0 : index
    %c0_44 = arith.constant 0 : index
    %61 = vector.load %arg8[%c0_42, %c0_43, %c0_44] : memref<2x128x128xf32, #tpu.memory_space<vmem>>, vector<2x128x128xf32>
    tpu.vector_store %arg8[%c0_42, %c0_43, %c0_44], %60 {strides = array<i32>} : memref<2x128x128xf32, #tpu.memory_space<vmem>>, vector<2x128x128xf32>,
    return
  }
  func.func @transform_0(%arg0: i32) -> (i32, i32, i32) {
    %c0_i32 = arith.constant 0 : i32
    %c0_i32_0 = arith.constant 0 : i32
    %c0_i32_1 = arith.constant 0 : i32
    return %arg0, %c0_i32, %c0_i32_0 : i32, i32, i32
  }
  func.func @transform_1(%arg0: i32) -> (i32, i32) {
    %c0_i32 = arith.constant 0 : i32
    %c0_i32_0 = arith.constant 0 : i32
    %c0_i32_1 = arith.constant 0 : i32
    return %c0_i32, %c0_i32_0 : i32, i32
  }
  func.func @transform_2(%arg0: i32) -> (i32, i32) {
    %c0_i32 = arith.constant 0 : i32
    %c0_i32_0 = arith.constant 0 : i32
    %c0_i32_1 = arith.constant 0 : i32
    return %c0_i32, %c0_i32_0 : i32, i32
  }
  func.func @transform_3(%arg0: i32) -> (i32, i32) {
    %c0_i32 = arith.constant 0 : i32
    %c0_i32_0 = arith.constant 0 : i32
    %c0_i32_1 = arith.constant 0 : i32
    return %c0_i32, %c0_i32_0 : i32, i32
  }
  func.func @transform_4(%arg0: i32) -> (i32, i32) {
    %c0_i32 = arith.constant 0 : i32
    %c0_i32_0 = arith.constant 0 : i32
    %c0_i32_1 = arith.constant 0 : i32
    return %c0_i32, %c0_i32_0 : i32, i32
  }
  func.func @transform_5(%arg0: i32) -> (i32, i32) {
    %c0_i32 = arith.constant 0 : i32
    %c0_i32_0 = arith.constant 0 : i32
    %c0_i32_1 = arith.constant 0 : i32
    return %c0_i32, %c0_i32_0 : i32, i32
  }
  func.func @transform_6(%arg0: i32) -> (i32, i32) {
    %c0_i32 = arith.constant 0 : i32
    %c0_i32_0 = arith.constant 0 : i32
    %c0_i32_1 = arith.constant 0 : i32
    return %c0_i32, %c0_i32_0 : i32, i32
  }
  func.func @transform_7(%arg0: i32) -> (i32, i32, i32) {
    %c0_i32 = arith.constant 0 : i32
    %c0_i32_0 = arith.constant 0 : i32
    %c0_i32_1 = arith.constant 0 : i32
    return %arg0, %c0_i32, %c0_i32_0 : i32, i32, i32
  }
  func.func @transform_8(%arg0: i32) -> (i32, i32, i32) {
    %c0_i32 = arith.constant 0 : i32
    %c0_i32_0 = arith.constant 0 : i32
    %c0_i32_1 = arith.constant 0 : i32
    return %arg0, %c0_i32, %c0_i32_0 : i32, i32, i32
  }
}

</mosaic_0001>

<llo_original>
// kernel: tpu_custom_call.1
$region0: #{tpu_custom_call.1}
  #allocation0 [shape = 'u32[]', space=smem, size = 0x4, offset = 0x4, fixed_abs, tag = 'smem constant byte address 0x4 - core index']
  #allocation1 [shape = 'u32[144,128]{1,0:T(1,128)}', space=vmem, size = 0x12000, scoped, tag = 'internal scratch']
  #allocation2 [shape = 'f32[2,132,128]{2,1,0:T(8,128)}', space=vmem, size = 0x22000, scoped, tag = 'scratch operand']
  %s0 = inlined_call_operand.hbm [shape: f32[4,128,128], index: 0, kind: input, shape index: {}]
  %s1 = inlined_call_operand.hbm [shape: f32[128,128], index: 1, kind: input, shape index: {}]
  %s2 = inlined_call_operand.vmem [shape: f32[1,128], index: 2, kind: input, shape index: {}]
  %s3 = inlined_call_operand.vmem [shape: f32[3,128], index: 3, kind: input, shape index: {}]
  %s4 = inlined_call_operand.vmem [shape: f32[1,128], index: 4, kind: input, shape index: {}]
  %s5 = inlined_call_operand.hbm [shape: f32[128,128], index: 5, kind: input, shape index: {}]
  %s6 = inlined_call_operand.vmem [shape: f32[1,128], index: 6, kind: input, shape index: {}]
  %s7 = inlined_call_operand.hbm [shape: f32[4,128,128], index: 7, kind: output, shape index: {0}]
  %s8 = inlined_call_operand.hbm [shape: f32[4,128,128], index: 8, kind: output, shape index: {1}]
  %9 = xla_tuple %s7, %s8
  %s10 = sld [smem:[#allocation0]]
  $region81: #{tpu_custom_call.1} parent=0
    _
  %s12 = ssub.s32 1, %s10
  %s13 = scalar_select 0, %s12, %s10
  $region1: #{tpu_custom_call.1} parent=0
    #allocation3 [shape = 'u8[262144]{0}', space=vmem, size = 0x40000, scoped, tag = 'input window, operand 0']
    #allocation4 [shape = 's32[2]{0}', space=sflag, size = 0x8, scoped, tag = 'scoped memory for tpu_custom_call.1']
    #allocation5 [shape = 's32[2]{0}', space=sflag, size = 0x8, scoped, tag = 'scoped memory for tpu_custom_call.1']
    #allocation6 [shape = 'u8[65536]{0}', space=vmem, size = 0x10000, scoped, tag = 'input window, operand 1, single buffered']
    #allocation7 [shape = 's32[1]{0}', space=sflag, size = 0x4, scoped, tag = 'scoped memory for tpu_custom_call.1']
    #allocation8 [shape = 'u8[65536]{0}', space=vmem, size = 0x10000, scoped, tag = 'input window, operand 5, single buffered']
    #allocation9 [shape = 'u8[262144]{0}', space=vmem, size = 0x40000, scoped, tag = 'output window, operand 0']
    #allocation10 [shape = 'u8[262144]{0}', space=vmem, size = 0x40000, scoped, tag = 'output window, operand 1']
    #allocation11 [shape = 's32[2]{0}', space=sflag, size = 0x8, scoped, tag = 'scoped memory for tpu_custom_call.1']
    %14 = vsyncpa [#allocation4], 0
    %s15 = scalar_lea.sflag [#allocation4], 1
    %16 = vsyncpa %s15, 0
    %17 = vsyncpa [#allocation7], 0
    %18 = vsyncpa [#allocation5], 0
    %s19 = scalar_lea.sflag [#allocation5], 1
    %20 = vsyncpa %s19, 0
    %21 = vsyncpa [#allocation11], 0
    %s22 = scalar_lea.sflag [#allocation11], 1
    %23 = vsyncpa %s22, 0
    loop: start=0, step=1, limit=4
    $region2: #{tpu_custom_call.1} parent=1 // loop_pre_header
      _
    $region3: #{tpu_custom_call.1} parent=1 // loop_header
      %s25 = sphi 0, %s29
      %p26 = scmp.ge.s32.totalorder %s25, 4
      %s35 = sphi 0, %s37
      %s38 = sphi 0, %s35
      %s39 = sphi 0, %s38
      %s55 = sphi 0, %s39
      %s59 = sphi 0, %s59
      %s61 = sphi 0, %s59
      %s62 = sphi 0, %s61
      %s76 = sphi 0, %s62
      %s80 = sphi 0, %s80
      %s82 = sphi 0, %s80
      %s83 = sphi 0, %s82
      %s97 = sphi 0, %s83
      %s101 = sphi 0, %s101
      %s103 = sphi 0, %s101
      %s104 = sphi 0, %s103
      %s118 = sphi 0, %s104
      %s122 = sphi 0, %s122
      %s124 = sphi 0, %s122
      %s125 = sphi 0, %s124
      %s139 = sphi 0, %s125
      %s143 = sphi 0, %s143
      %s145 = sphi 0, %s143
      %s146 = sphi 0, %s145
      %s160 = sphi 0, %s146
      %s164 = sphi 0, %s164
      %s166 = sphi 0, %s164
      %s167 = sphi 0, %s166
      %s181 = sphi 0, %s167
      %s187 = sphi 0, %s189
      %s190 = sphi 0, %s187
      %s191 = sphi 0, %s190
      %s207 = sphi 0, %s191
      %s213 = sphi 0, %s215
      %s216 = sphi 0, %s213
      %s217 = sphi 0, %s216
      %s233 = sphi 0, %s217
    $region4: #{tpu_custom_call.1} parent=1 // loop_header_branch
      %28 = sbr.rel (%p26) target = $region8
    $region5: #{tpu_custom_call.1} parent=1 // loop_body
      %s30 = ssub.s32 %s25, 1
      %s31 = ssub.s32 %s25, 2
      %s32 = sadd.s32 %s25, 1
      %s33 = ssub.s32 %s25, %s32
      %p34 = scmp.eq.s32.totalorder %s33, 0
      %s36 = sadd.s32 %s35, 1
      %s37 = scalar_select %p34, %s35, %s36
      %p40 = pneg %p34
      %p41 = scmp.eq.s32.totalorder %s25, 1
      %p42 = por %p40, %p41
      %p43 = scmp.ne.s32.totalorder %s35, %s38
      %p44 = scmp.eq.s32.totalorder %s25, 0
      %p45 = por %p43, %p44
      %p46 = scmp.ne.s32.totalorder %s35, %s38
      %p47 = scmp.eq.s32.totalorder %s30, 1
      %p48 = por %p46, %p47
      %p49 = scmp.ne.s32.totalorder %s38, %s39
      %p50 = scmp.eq.s32.totalorder %s30, 0
      %p51 = por %p49, %p50
      %p52 = scmp.ne.s32.totalorder %s38, %s39
      %p53 = scmp.eq.s32.totalorder %s31, 1
      %p54 = por %p52, %p53
      %p56 = scmp.ne.s32.totalorder %s39, %s55
      %p57 = scmp.eq.s32.totalorder %s31, 0
      %p58 = por %p56, %p57
      %s60 = sadd.s32 %s59, 1
      %p63 = scmp.eq.s32.totalorder %s25, 1
      %p64 = scmp.ne.s32.totalorder %s59, %s61
      %p65 = scmp.eq.s32.totalorder %s25, 0
      %p66 = por %p64, %p65
      %p67 = scmp.ne.s32.totalorder %s59, %s61
      %p68 = scmp.eq.s32.totalorder %s30, 1
      %p69 = por %p67, %p68
      %p70 = scmp.ne.s32.totalorder %s61, %s62
      %p71 = scmp.eq.s32.totalorder %s30, 0
      %p72 = por %p70, %p71
      %p73 = scmp.ne.s32.totalorder %s61, %s62
      %p74 = scmp.eq.s32.totalorder %s31, 1
      %p75 = por %p73, %p74
      %p77 = scmp.ne.s32.totalorder %s62, %s76
      %p78 = scmp.eq.s32.totalorder %s31, 0
      %p79 = por %p77, %p78
      %s81 = sadd.s32 %s80, 1
      %p84 = scmp.eq.s32.totalorder %s25, 1
      %p85 = scmp.ne.s32.totalorder %s80, %s82
      %p86 = scmp.eq.s32.totalorder %s25, 0
      %p87 = por %p85, %p86
      %p88 = scmp.ne.s32.totalorder %s80, %s82
      %p89 = scmp.eq.s32.totalorder %s30, 1
      %p90 = por %p88, %p89
      %p91 = scmp.ne.s32.totalorder %s82, %s83
      %p92 = scmp.eq.s32.totalorder %s30, 0
      %p93 = por %p91, %p92
      %p94 = scmp.ne.s32.totalorder %s82, %s83
      %p95 = scmp.eq.s32.totalorder %s31, 1
      %p96 = por %p94, %p95
      %p98 = scmp.ne.s32.totalorder %s83, %s97
      %p99 = scmp.eq.s32.totalorder %s31, 0
      %p100 = por %p98, %p99
      %s102 = sadd.s32 %s101, 1
      %p105 = scmp.eq.s32.totalorder %s25, 1
      %p106 = scmp.ne.s32.totalorder %s101, %s103
      %p107 = scmp.eq.s32.totalorder %s25, 0
      %p108 = por %p106, %p107
      %p109 = scmp.ne.s32.totalorder %s101, %s103
      %p110 = scmp.eq.s32.totalorder %s30, 1
      %p111 = por %p109, %p110
      %p112 = scmp.ne.s32.totalorder %s103, %s104
      %p113 = scmp.eq.s32.totalorder %s30, 0
      %p114 = por %p112, %p113
      %p115 = scmp.ne.s32.totalorder %s103, %s104
      %p116 = scmp.eq.s32.totalorder %s31, 1
      %p117 = por %p115, %p116
      %p119 = scmp.ne.s32.totalorder %s104, %s118
      %p120 = scmp.eq.s32.totalorder %s31, 0
      %p121 = por %p119, %p120
      %s123 = sadd.s32 %s122, 1
      %p126 = scmp.eq.s32.totalorder %s25, 1
      %p127 = scmp.ne.s32.totalorder %s122, %s124
      %p128 = scmp.eq.s32.totalorder %s25, 0
      %p129 = por %p127, %p128
      %p130 = scmp.ne.s32.totalorder %s122, %s124
      %p131 = scmp.eq.s32.totalorder %s30, 1
      %p132 = por %p130, %p131
      %p133 = scmp.ne.s32.totalorder %s124, %s125
      %p134 = scmp.eq.s32.totalorder %s30, 0
      %p135 = por %p133, %p134
      %p136 = scmp.ne.s32.totalorder %s124, %s125
      %p137 = scmp.eq.s32.totalorder %s31, 1
      %p138 = por %p136, %p137
      %p140 = scmp.ne.s32.totalorder %s125, %s139
      %p141 = scmp.eq.s32.totalorder %s31, 0
      %p142 = por %p140, %p141
      %s144 = sadd.s32 %s143, 1
      %p147 = scmp.eq.s32.totalorder %s25, 1
      %p148 = scmp.ne.s32.totalorder %s143, %s145
      %p149 = scmp.eq.s32.totalorder %s25, 0
      %p150 = por %p148, %p149
      %p151 = scmp.ne.s32.totalorder %s143, %s145
      %p152 = scmp.eq.s32.totalorder %s30, 1
      %p153 = por %p151, %p152
      %p154 = scmp.ne.s32.totalorder %s145, %s146
      %p155 = scmp.eq.s32.totalorder %s30, 0
      %p156 = por %p154, %p155
      %p157 = scmp.ne.s32.totalorder %s145, %s146
      %p158 = scmp.eq.s32.totalorder %s31, 1
      %p159 = por %p157, %p158
      %p161 = scmp.ne.s32.totalorder %s146, %s160
      %p162 = scmp.eq.s32.totalorder %s31, 0
      %p163 = por %p161, %p162
      %s165 = sadd.s32 %s164, 1
      %p168 = scmp.eq.s32.totalorder %s25, 1
      %p169 = scmp.ne.s32.totalorder %s164, %s166
      %p170 = scmp.eq.s32.totalorder %s25, 0
      %p171 = por %p169, %p170
      %p172 = scmp.ne.s32.totalorder %s164, %s166
      %p173 = scmp.eq.s32.totalorder %s30, 1
      %p174 = por %p172, %p173
      %p175 = scmp.ne.s32.totalorder %s166, %s167
      %p176 = scmp.eq.s32.totalorder %s30, 0
      %p177 = por %p175, %p176
      %p178 = scmp.ne.s32.totalorder %s166, %s167
      %p179 = scmp.eq.s32.totalorder %s31, 1
      %p180 = por %p178, %p179
      %p182 = scmp.ne.s32.totalorder %s167, %s181
      %p183 = scmp.eq.s32.totalorder %s31, 0
      %p184 = por %p182, %p183
      %s185 = ssub.s32 %s25, %s32
      %p186 = scmp.eq.s32.totalorder %s185, 0
      %s188 = sadd.s32 %s187, 1
      %s189 = scalar_select %p186, %s187, %s188
      %p192 = pneg %p186
      %p193 = scmp.eq.s32.totalorder %s25, 1
      %p194 = por %p192, %p193
      %p195 = scmp.ne.s32.totalorder %s187, %s190
      %p196 = scmp.eq.s32.totalorder %s25, 0
      %p197 = por %p195, %p196
      %p198 = scmp.ne.s32.totalorder %s187, %s190
      %p199 = scmp.eq.s32.totalorder %s30, 1
      %p200 = por %p198, %p199
      %p201 = scmp.ne.s32.totalorder %s190, %s191
      %p202 = scmp.eq.s32.totalorder %s30, 0
      %p203 = por %p201, %p202
      %p204 = scmp.ne.s32.totalorder %s190, %s191
      %p205 = scmp.eq.s32.totalorder %s31, 1
      %p206 = por %p204, %p205
      %p208 = scmp.ne.s32.totalorder %s191, %s207
      %p209 = scmp.eq.s32.totalorder %s31, 0
      %p210 = por %p208, %p209
      %s211 = ssub.s32 %s25, %s32
      %p212 = scmp.eq.s32.totalorder %s211, 0
      %s214 = sadd.s32 %s213, 1
      %s215 = scalar_select %p212, %s213, %s214
      %p218 = pneg %p212
      %p219 = scmp.eq.s32.totalorder %s25, 1
      %p220 = por %p218, %p219
      %p221 = scmp.ne.s32.totalorder %s213, %s216
      %p222 = scmp.eq.s32.totalorder %s25, 0
      %p223 = por %p221, %p222
      %p224 = scmp.ne.s32.totalorder %s213, %s216
      %p225 = scmp.eq.s32.totalorder %s30, 1
      %p226 = por %p224, %p225
      %p227 = scmp.ne.s32.totalorder %s216, %s217
      %p228 = scmp.eq.s32.totalorder %s30, 0
      %p229 = por %p227, %p228
      %p230 = scmp.ne.s32.totalorder %s216, %s217
      %p231 = scmp.eq.s32.totalorder %s31, 1
      %p232 = por %p230, %p231
      %p234 = scmp.ne.s32.totalorder %s217, %s233
      %p235 = scmp.eq.s32.totalorder %s31, 0
      %p236 = por %p234, %p235
      %p237 = scmp.le.s32.totalorder 1, %s25
      %p238 = scmp.lt.s32.totalorder %s25, 3
      %p239 = pnand %p237, %p238
      %p240 = pneg %p239
      // Predicated region
      $region9: #{tpu_custom_call.1} parent=5 // pred_check
        _
      $region10: #{tpu_custom_call.1} parent=5 // pred_check_branch
        %242 = sbr.rel (%p239) target = $region12
      $region11: #{tpu_custom_call.1} parent=5 // pred_region
        %s243 = ssub.s32 %s25, 1
        // Predicated region
        $region13: #{tpu_custom_call.1} parent=11 // pred_check
          %p244 = pneg %p72
        $region14: #{tpu_custom_call.1} parent=11 // pred_check_branch
          %246 = sbr.rel (%p244) target = $region16
        $region15: #{tpu_custom_call.1} parent=11 // pred_region
          %s248 = ssub.s32 2048, 2048
          %249 = vsyncadd [#allocation7], %s248
          %s250 = sshll.u32 [#allocation6], 4
          %s251 = int_to_ptr.vmem [resolvable:$true] %s250
          %256 = dma.hbm_to_vmem [thread:$0]  %s1, 2048, %s251, [#allocation7], 128, 128, 8
        $region16: #{tpu_custom_call.1} parent=11 // pred_fallthru
          _
        // Predicated region
        $region17: #{tpu_custom_call.1} parent=11 // pred_check
          %p257 = pneg %p93
        $region18: #{tpu_custom_call.1} parent=11 // pred_check_branch
          %259 = sbr.rel (%p257) target = $region20
        $region19: #{tpu_custom_call.1} parent=11 // pred_region
          _
        $region20: #{tpu_custom_call.1} parent=11 // pred_fallthru
          _
        // Predicated region
        $region21: #{tpu_custom_call.1} parent=11 // pred_check
          %p260 = pneg %p114
        $region22: #{tpu_custom_call.1} parent=11 // pred_check_branch
          %262 = sbr.rel (%p260) target = $region24
        $region23: #{tpu_custom_call.1} parent=11 // pred_region
          _
        $region24: #{tpu_custom_call.1} parent=11 // pred_fallthru
          _
        // Predicated region
        $region25: #{tpu_custom_call.1} parent=11 // pred_check
          %p263 = pneg %p135
        $region26: #{tpu_custom_call.1} parent=11 // pred_check_branch
          %265 = sbr.rel (%p263) target = $region28
        $region27: #{tpu_custom_call.1} parent=11 // pred_region
          _
        $region28: #{tpu_custom_call.1} parent=11 // pred_fallthru
          _
        // Predicated region
        $region29: #{tpu_custom_call.1} parent=11 // pred_check
          %p266 = pneg %p156
        $region30: #{tpu_custom_call.1} parent=11 // pred_check_branch
          %268 = sbr.rel (%p266) target = $region32
        $region31: #{tpu_custom_call.1} parent=11 // pred_region
          %s270 = ssub.s32 2048, 2048
          %271 = vsyncadd [#allocation7], %s270
          %s272 = sshll.u32 [#allocation8], 4
          %s273 = int_to_ptr.vmem [resolvable:$true] %s272
          %278 = dma.hbm_to_vmem [thread:$0]  %s5, 2048, %s273, [#allocation7], 128, 128, 8
        $region32: #{tpu_custom_call.1} parent=11 // pred_fallthru
          _
        // Predicated region
        $region33: #{tpu_custom_call.1} parent=11 // pred_check
          %p279 = pneg %p177
        $region34: #{tpu_custom_call.1} parent=11 // pred_check_branch
          %281 = sbr.rel (%p279) target = $region36
        $region35: #{tpu_custom_call.1} parent=11 // pred_region
          _
        $region36: #{tpu_custom_call.1} parent=11 // pred_fallthru
          _
      $region12: #{tpu_custom_call.1} parent=5 // pred_fallthru
        _
      %p282 = scmp.lt.s32.totalorder %s25, 2
      // Predicated region
      $region37: #{tpu_custom_call.1} parent=5 // pred_check
        %p283 = pneg %p282
      $region38: #{tpu_custom_call.1} parent=5 // pred_check_branch
        %285 = sbr.rel (%p283) target = $region40
      $region39: #{tpu_custom_call.1} parent=5 // pred_region
        // Predicated region
        $region41: #{tpu_custom_call.1} parent=39 // pred_check
          %p286 = pneg %p45
        $region42: #{tpu_custom_call.1} parent=39 // pred_check_branch
          %288 = sbr.rel (%p286) target = $region44
        $region43: #{tpu_custom_call.1} parent=39 // pred_region
          %s289 = sand.u32 %s35, 1
          %s290 = scalar_lea.sflag [#allocation4], %s289
          %s291 = sand.u32 %s35, 1
          %s292 = smul.addr %s291, 256
          %s293 = scalar_lea.vmem [#allocation3], %s292
          %s294 = smul.u32 2, %s25
          %s296 = ssub.s32 4096, 4096
          %297 = vsyncadd %s290, %s296
          %s298 = smul.addr %s294, 16
          %s299 = smul.addr %s298, 128
          %s300 = scalar_lea.hbm %s0, %s299
          %s301 = sshll.u32 %s293, 4
          %s302 = int_to_ptr.vmem [resolvable:$true] %s301
          %307 = dma.hbm_to_vmem [thread:$0]  %s300, 4096, %s302, %s290, 128, 128, 8
        $region44: #{tpu_custom_call.1} parent=39 // pred_fallthru
          _
      $region40: #{tpu_custom_call.1} parent=5 // pred_fallthru
        _
      %p308 = scmp.le.s32.totalorder 1, %s25
      %p309 = scmp.lt.s32.totalorder %s25, 3
      %p310 = pnand %p308, %p309
      %p311 = pneg %p310
      // Predicated region
      $region45: #{tpu_custom_call.1} parent=5 // pred_check
        _
      $region46: #{tpu_custom_call.1} parent=5 // pred_check_branch
        %313 = sbr.rel (%p310) target = $region48
      $region47: #{tpu_custom_call.1} parent=5 // pred_region
        %s314 = ssub.s32 %s25, 1
        %s315 = sand.u32 %s38, 1
        %s316 = scalar_lea.sflag [#allocation4], %s315
        %s317 = sand.u32 %s38, 1
        %s318 = smul.addr %s317, 256
        %s319 = scalar_lea.vmem [#allocation3], %s318
        // Predicated region
        $region49: #{tpu_custom_call.1} parent=47 // pred_check
          %p320 = pneg %p51
        $region50: #{tpu_custom_call.1} parent=47 // pred_check_branch
          %322 = sbr.rel (%p320) target = $region52
        $region51: #{tpu_custom_call.1} parent=47 // pred_region
          %323 = dma.done %s316, 4096
        $region52: #{tpu_custom_call.1} parent=47 // pred_fallthru
          _
        // Predicated region
        $region53: #{tpu_custom_call.1} parent=47 // pred_check
          %p324 = pneg %p72
        $region54: #{tpu_custom_call.1} parent=47 // pred_check_branch
          %326 = sbr.rel (%p324) target = $region56
        $region55: #{tpu_custom_call.1} parent=47 // pred_region
          %327 = dma.done [#allocation7], 2048
        $region56: #{tpu_custom_call.1} parent=47 // pred_fallthru
          _
        // Predicated region
        $region57: #{tpu_custom_call.1} parent=47 // pred_check
          %p328 = pneg %p156
        $region58: #{tpu_custom_call.1} parent=47 // pred_check_branch
          %330 = sbr.rel (%p328) target = $region60
        $region59: #{tpu_custom_call.1} parent=47 // pred_region
          %331 = dma.done [#allocation7], 2048
        $region60: #{tpu_custom_call.1} parent=47 // pred_fallthru
          _
        %s332 = sand.u32 %s38, 1
        %s333 = scalar_lea.sflag [#allocation4], %s332
        %s334 = sand.u32 %s38, 1
        %s335 = smul.addr %s334, 256
        %s336 = scalar_lea.vmem [#allocation3], %s335
        %p337 = pneg %p51
        %p338 = pneg %p48
        %p339 = pneg %p72
        %p340 = pneg %p69
        %p341 = pneg %p93
        %p342 = pneg %p90
        %p343 = pneg %p114
        %p344 = pneg %p111
        %p345 = pneg %p135
        %p346 = pneg %p132
        %p347 = pneg %p156
        %p348 = pneg %p153
        %p349 = pneg %p177
        %p350 = pneg %p174
        %p351 = pneg %p203
        %p352 = pneg %p200
        %s353 = sand.u32 %s190, 1
        %s354 = scalar_lea.sflag [#allocation5], %s353
        %s355 = sand.u32 %s190, 1
        %s356 = smul.addr %s355, 256
        %s357 = scalar_lea.vmem [#allocation9], %s356
        %p358 = pneg %p229
        %p359 = pneg %p226
        %s360 = sand.u32 %s216, 1
        %s361 = scalar_lea.sflag [#allocation11], %s360
        %s362 = sand.u32 %s216, 1
        %s363 = smul.addr %s362, 256
        %s364 = scalar_lea.vmem [#allocation10], %s363
        %s365 = smul.u32 2, %s30
        %s366 = smul.u32 2, %s30
        %s367 = smul.u32 2, %s30
        %v368 = vld [vmem:[%s319] sm:$0xff]
        %v369 = vld [vmem:[%s319 + $0x8] sm:$0xff]
        %v370 = vld [vmem:[%s319 + $0x10] sm:$0xff]
        %v371 = vld [vmem:[%s319 + $0x18] sm:$0xff]
        %v372 = vld [vmem:[%s319 + $0x20] sm:$0xff]
        %v373 = vld [vmem:[%s319 + $0x28] sm:$0xff]
        %v374 = vld [vmem:[%s319 + $0x30] sm:$0xff]
        %v375 = vld [vmem:[%s319 + $0x38] sm:$0xff]
        %v376 = vld [vmem:[%s319 + $0x40] sm:$0xff]
        %v377 = vld [vmem:[%s319 + $0x48] sm:$0xff]
        %v378 = vld [vmem:[%s319 + $0x50] sm:$0xff]
        %v379 = vld [vmem:[%s319 + $0x58] sm:$0xff]
        %v380 = vld [vmem:[%s319 + $0x60] sm:$0xff]
        %v381 = vld [vmem:[%s319 + $0x68] sm:$0xff]
        %v382 = vld [vmem:[%s319 + $0x70] sm:$0xff]
        %v383 = vld [vmem:[%s319 + $0x78] sm:$0xff]
        %v384 = vld [vmem:[%s319 + $0x80] sm:$0xff]
        %v385 = vld [vmem:[%s319 + $0x88] sm:$0xff]
        %v386 = vld [vmem:[%s319 + $0x90] sm:$0xff]
        %v387 = vld [vmem:[%s319 + $0x98] sm:$0xff]
        %v388 = vld [vmem:[%s319 + $0xa0] sm:$0xff]
        %v389 = vld [vmem:[%s319 + $0xa8] sm:$0xff]
        %v390 = vld [vmem:[%s319 + $0xb0] sm:$0xff]
        %v391 = vld [vmem:[%s319 + $0xb8] sm:$0xff]
        %v392 = vld [vmem:[%s319 + $0xc0] sm:$0xff]
        %v393 = vld [vmem:[%s319 + $0xc8] sm:$0xff]
        %v394 = vld [vmem:[%s319 + $0xd0] sm:$0xff]
        %v395 = vld [vmem:[%s319 + $0xd8] sm:$0xff]
        %v396 = vld [vmem:[%s319 + $0xe0] sm:$0xff]
        %v397 = vld [vmem:[%s319 + $0xe8] sm:$0xff]
        %v398 = vld [vmem:[%s319 + $0xf0] sm:$0xff]
        %v399 = vld [vmem:[%s319 + $0xf8] sm:$0xff]
        %v400 = vld [vmem:[#allocation6] sm:$0xff]
        %v401 = vld [vmem:[#allocation6 + $0x8] sm:$0xff]
        %v402 = vld [vmem:[#allocation6 + $0x10] sm:$0xff]
        %v403 = vld [vmem:[#allocation6 + $0x18] sm:$0xff]
        %v404 = vld [vmem:[#allocation6 + $0x20] sm:$0xff]
        %v405 = vld [vmem:[#allocation6 + $0x28] sm:$0xff]
        %v406 = vld [vmem:[#allocation6 + $0x30] sm:$0xff]
        %v407 = vld [vmem:[#allocation6 + $0x38] sm:$0xff]
        %v408 = vld [vmem:[#allocation6 + $0x40] sm:$0xff]
        %v409 = vld [vmem:[#allocation6 + $0x48] sm:$0xff]
        %v410 = vld [vmem:[#allocation6 + $0x50] sm:$0xff]
        %v411 = vld [vmem:[#allocation6 + $0x58] sm:$0xff]
        %v412 = vld [vmem:[#allocation6 + $0x60] sm:$0xff]
        %v413 = vld [vmem:[#allocation6 + $0x68] sm:$0xff]
        %v414 = vld [vmem:[#allocation6 + $0x70] sm:$0xff]
        %v415 = vld [vmem:[#allocation6 + $0x78] sm:$0xff]
        %v416 = vld [vmem:[%s2] sm:$0x1]
        %v418 = vlaneseq
        %v419 = vshrl.u32 %v418, 7
        %v420 = vsub.s32 0, %v419
        %v421 = vrot.slane %v416, %v420
        %423 = vmatprep.subr.mxu0 0.0
        %424 = vmatpush1.msra.mxu0 %v415
        %425 = vmatprep.subr.mxu0 0.0
        %426 = vmatpush1.msra.mxu0 %v414
        %427 = vmatprep.subr.mxu0 0.0
        %428 = vmatpush1.msra.mxu0 %v413
        %429 = vmatprep.subr.mxu0 0.0
        %430 = vmatpush1.msra.mxu0 %v412
        %431 = vmatprep.subr.mxu0 0.0
        %432 = vmatpush1.msra.mxu0 %v411
        %433 = vmatprep.subr.mxu0 0.0
        %434 = vmatpush1.msra.mxu0 %v410
        %435 = vmatprep.subr.mxu0 0.0
        %436 = vmatpush1.msra.mxu0 %v409
        %437 = vmatprep.subr.mxu0 0.0
        %438 = vmatpush1.msra.mxu0 %v408
        %439 = vmatprep.subr.mxu0 0.0
        %440 = vmatpush1.msra.mxu0 %v407
        %441 = vmatprep.subr.mxu0 0.0
        %442 = vmatpush1.msra.mxu0 %v406
        %443 = vmatprep.subr.mxu0 0.0
        %444 = vmatpush1.msra.mxu0 %v405
        %445 = vmatprep.subr.mxu0 0.0
        %446 = vmatpush1.msra.mxu0 %v404
        %447 = vmatprep.subr.mxu0 0.0
        %448 = vmatpush1.msra.mxu0 %v403
        %449 = vmatprep.subr.mxu0 0.0
        %450 = vmatpush1.msra.mxu0 %v402
        %451 = vmatprep.subr.mxu0 0.0
        %452 = vmatpush1.msra.mxu0 %v401
        %453 = vmatprep.subr.mxu0 0.0
        %454 = vmatpush1.msra.mxu0 %v400
        %455 = vmatprep.subr.mxu0 0.0
        %456 = vmatpush2.msra.mxu0 0.0
        %457 = vmatprep.subr.mxu0 0.0
        %458 = vmatpush2.msra.mxu0 0.0
        %459 = vmatprep.subr.mxu0 0.0
        %460 = vmatpush2.msra.mxu0 0.0
        %461 = vmatprep.subr.mxu0 0.0
        %462 = vmatpush2.msra.mxu0 0.0
        %463 = vmatprep.subr.mxu0 0.0
        %464 = vmatpush2.msra.mxu0 0.0
        %465 = vmatprep.subr.mxu0 0.0
        %466 = vmatpush2.msra.mxu0 0.0
        %467 = vmatprep.subr.mxu0 0.0
        %468 = vmatpush2.msra.mxu0 0.0
        %469 = vmatprep.subr.mxu0 0.0
        %470 = vmatpush2.msra.mxu0 0.0
        %471 = vmatprep.subr.mxu0 0.0
        %472 = vmatpush2.msra.mxu0 0.0
        %473 = vmatprep.subr.mxu0 0.0
        %474 = vmatpush2.msra.mxu0 0.0
        %475 = vmatprep.subr.mxu0 0.0
        %476 = vmatpush2.msra.mxu0 0.0
        %477 = vmatprep.subr.mxu0 0.0
        %478 = vmatpush2.msra.mxu0 0.0
        %479 = vmatprep.subr.mxu0 0.0
        %480 = vmatpush2.msra.mxu0 0.0
        %481 = vmatprep.subr.mxu0 0.0
        %482 = vmatpush2.msra.mxu0 0.0
        %483 = vmatprep.subr.mxu0 0.0
        %484 = vmatpush2.msra.mxu0 0.0
        %485 = vmatprep.subr.mxu0 0.0
        %486 = vmatpush2.msra.mxu0 0.0
        %487 = vmatprep.mubr.f32.mxu0 0.0
        %488 = vmatmul.mubr.f32.gmra.mxu0 %v368
        %v489 = vpop.f32.mrf.mxu0
        %v490 = vadd.f32 %v421, %v489
        %v491 = vpop.f32.mrf.mxu0
        %492 = vmatprep.mubr.f32.mxu0 0.0
        %493 = vmatmul.mubr.f32.gmra.mxu0 %v369
        %v494 = vpop.f32.mrf.mxu0
        %v495 = vadd.f32 %v421, %v494
        %v496 = vpop.f32.mrf.mxu0
        %497 = vmatprep.mubr.f32.mxu0 0.0
        %498 = vmatmul.mubr.f32.gmra.mxu0 %v370
        %v499 = vpop.f32.mrf.mxu0
        %v500 = vadd.f32 %v421, %v499
        %v501 = vpop.f32.mrf.mxu0
        %502 = vmatprep.mubr.f32.mxu0 0.0
        %503 = vmatmul.mubr.f32.gmra.mxu0 %v371
        %v504 = vpop.f32.mrf.mxu0
        %v505 = vadd.f32 %v421, %v504
        %v506 = vpop.f32.mrf.mxu0
        %507 = vmatprep.mubr.f32.mxu0 0.0
        %508 = vmatmul.mubr.f32.gmra.mxu0 %v372
        %v509 = vpop.f32.mrf.mxu0
        %v510 = vadd.f32 %v421, %v509
        %v511 = vpop.f32.mrf.mxu0
        %512 = vmatprep.mubr.f32.mxu0 0.0
        %513 = vmatmul.mubr.f32.gmra.mxu0 %v373
        %v514 = vpop.f32.mrf.mxu0
        %v515 = vadd.f32 %v421, %v514
        %v516 = vpop.f32.mrf.mxu0
        %517 = vmatprep.mubr.f32.mxu0 0.0
        %518 = vmatmul.mubr.f32.gmra.mxu0 %v374
        %v519 = vpop.f32.mrf.mxu0
        %v520 = vadd.f32 %v421, %v519
        %v521 = vpop.f32.mrf.mxu0
        %522 = vmatprep.mubr.f32.mxu0 0.0
        %523 = vmatmul.mubr.f32.gmra.mxu0 %v375
        %v524 = vpop.f32.mrf.mxu0
        %v525 = vadd.f32 %v421, %v524
        %v526 = vpop.f32.mrf.mxu0
        %527 = vmatprep.mubr.f32.mxu0 0.0
        %528 = vmatmul.mubr.f32.gmra.mxu0 %v376
        %v529 = vpop.f32.mrf.mxu0
        %v530 = vadd.f32 %v421, %v529
        %v531 = vpop.f32.mrf.mxu0
        %532 = vmatprep.mubr.f32.mxu0 0.0
        %533 = vmatmul.mubr.f32.gmra.mxu0 %v377
        %v534 = vpop.f32.mrf.mxu0
        %v535 = vadd.f32 %v421, %v534
        %v536 = vpop.f32.mrf.mxu0
        %537 = vmatprep.mubr.f32.mxu0 0.0
        %538 = vmatmul.mubr.f32.gmra.mxu0 %v378
        %v539 = vpop.f32.mrf.mxu0
        %v540 = vadd.f32 %v421, %v539
        %v541 = vpop.f32.mrf.mxu0
        %542 = vmatprep.mubr.f32.mxu0 0.0
        %543 = vmatmul.mubr.f32.gmra.mxu0 %v379
        %v544 = vpop.f32.mrf.mxu0
        %v545 = vadd.f32 %v421, %v544
        %v546 = vpop.f32.mrf.mxu0
        %547 = vmatprep.mubr.f32.mxu0 0.0
        %548 = vmatmul.mubr.f32.gmra.mxu0 %v380
        %v549 = vpop.f32.mrf.mxu0
        %v550 = vadd.f32 %v421, %v549
        %v551 = vpop.f32.mrf.mxu0
        %552 = vmatprep.mubr.f32.mxu0 0.0
        %553 = vmatmul.mubr.f32.gmra.mxu0 %v381
        %v554 = vpop.f32.mrf.mxu0
        %v555 = vadd.f32 %v421, %v554
        %v556 = vpop.f32.mrf.mxu0
        %557 = vmatprep.mubr.f32.mxu0 0.0
        %558 = vmatmul.mubr.f32.gmra.mxu0 %v382
        %v559 = vpop.f32.mrf.mxu0
        %v560 = vadd.f32 %v421, %v559
        %v561 = vpop.f32.mrf.mxu0
        %562 = vmatprep.mubr.f32.mxu0 0.0
        %563 = vmatmul.mubr.f32.gmra.mxu0 %v383
        %v564 = vpop.f32.mrf.mxu0
        %v565 = vadd.f32 %v421, %v564
        %v566 = vpop.f32.mrf.mxu0
        %567 = vmatprep.mubr.f32.mxu0 0.0
        %568 = vmatmul.mubr.f32.gmra.mxu0 %v384
        %v569 = vpop.f32.mrf.mxu0
        %v570 = vadd.f32 %v421, %v569
        %v571 = vpop.f32.mrf.mxu0
        %572 = vmatprep.mubr.f32.mxu0 0.0
        %573 = vmatmul.mubr.f32.gmra.mxu0 %v385
        %v574 = vpop.f32.mrf.mxu0
        %v575 = vadd.f32 %v421, %v574
        %v576 = vpop.f32.mrf.mxu0
        %577 = vmatprep.mubr.f32.mxu0 0.0
        %578 = vmatmul.mubr.f32.gmra.mxu0 %v386
        %v579 = vpop.f32.mrf.mxu0
        %v580 = vadd.f32 %v421, %v579
        %v581 = vpop.f32.mrf.mxu0
        %582 = vmatprep.mubr.f32.mxu0 0.0
        %583 = vmatmul.mubr.f32.gmra.mxu0 %v387
        %v584 = vpop.f32.mrf.mxu0
        %v585 = vadd.f32 %v421, %v584
        %v586 = vpop.f32.mrf.mxu0
        %587 = vmatprep.mubr.f32.mxu0 0.0
        %588 = vmatmul.mubr.f32.gmra.mxu0 %v388
        %v589 = vpop.f32.mrf.mxu0
        %v590 = vadd.f32 %v421, %v589
        %v591 = vpop.f32.mrf.mxu0
        %592 = vmatprep.mubr.f32.mxu0 0.0
        %593 = vmatmul.mubr.f32.gmra.mxu0 %v389
        %v594 = vpop.f32.mrf.mxu0
        %v595 = vadd.f32 %v421, %v594
        %v596 = vpop.f32.mrf.mxu0
        %597 = vmatprep.mubr.f32.mxu0 0.0
        %598 = vmatmul.mubr.f32.gmra.mxu0 %v390
        %v599 = vpop.f32.mrf.mxu0
        %v600 = vadd.f32 %v421, %v599
        %v601 = vpop.f32.mrf.mxu0
        %602 = vmatprep.mubr.f32.mxu0 0.0
        %603 = vmatmul.mubr.f32.gmra.mxu0 %v391
        %v604 = vpop.f32.mrf.mxu0
        %v605 = vadd.f32 %v421, %v604
        %v606 = vpop.f32.mrf.mxu0
        %607 = vmatprep.mubr.f32.mxu0 0.0
        %608 = vmatmul.mubr.f32.gmra.mxu0 %v392
        %v609 = vpop.f32.mrf.mxu0
        %v610 = vadd.f32 %v421, %v609
        %v611 = vpop.f32.mrf.mxu0
        %612 = vmatprep.mubr.f32.mxu0 0.0
        %613 = vmatmul.mubr.f32.gmra.mxu0 %v393
        %v614 = vpop.f32.mrf.mxu0
        %v615 = vadd.f32 %v421, %v614
        %v616 = vpop.f32.mrf.mxu0
        %617 = vmatprep.mubr.f32.mxu0 0.0
        %618 = vmatmul.mubr.f32.gmra.mxu0 %v394
        %v619 = vpop.f32.mrf.mxu0
        %v620 = vadd.f32 %v421, %v619
        %v621 = vpop.f32.mrf.mxu0
        %622 = vmatprep.mubr.f32.mxu0 0.0
        %623 = vmatmul.mubr.f32.gmra.mxu0 %v395
        %v624 = vpop.f32.mrf.mxu0
        %v625 = vadd.f32 %v421, %v624
        %v626 = vpop.f32.mrf.mxu0
        %627 = vmatprep.mubr.f32.mxu0 0.0
        %628 = vmatmul.mubr.f32.gmra.mxu0 %v396
        %v629 = vpop.f32.mrf.mxu0
        %v630 = vadd.f32 %v421, %v629
        %v631 = vpop.f32.mrf.mxu0
        %632 = vmatprep.mubr.f32.mxu0 0.0
        %633 = vmatmul.mubr.f32.gmra.mxu0 %v397
        %v634 = vpop.f32.mrf.mxu0
        %v635 = vadd.f32 %v421, %v634
        %v636 = vpop.f32.mrf.mxu0
        %637 = vmatprep.mubr.f32.mxu0 0.0
        %638 = vmatmul.mubr.f32.gmra.mxu0 %v398
        %v639 = vpop.f32.mrf.mxu0
        %v640 = vadd.f32 %v421, %v639
        %v641 = vpop.f32.mrf.mxu0
        %642 = vmatprep.mubr.f32.mxu0 0.0
        %643 = vmatmul.mubr.f32.gmra.mxu0 %v399
        %v644 = vpop.f32.mrf.mxu0
        %v645 = vadd.f32 %v421, %v644
        %v646 = vpop.f32.mrf.mxu0
        %647 = vdwg.mxu0
        %648 = vst [vmem:[#allocation2] sm:$0x3] 0.0
        %649 = vst [vmem:[#allocation2 + $0x88] sm:$0x3] 0.0
        %650 = vst [vmem:[#allocation2 + $0x82] sm:$0x3] 0.0
        %651 = vst [vmem:[#allocation2 + $0x10a] sm:$0x3] 0.0
        %652 = vst [vmem:[#allocation2 + $0x2] sm:$0xff] %v490
        %653 = vst [vmem:[#allocation2 + $0xa] sm:$0xff] %v495
        %654 = vst [vmem:[#allocation2 + $0x12] sm:$0xff] %v500
        %655 = vst [vmem:[#allocation2 + $0x1a] sm:$0xff] %v505
        %656 = vst [vmem:[#allocation2 + $0x22] sm:$0xff] %v510
        %657 = vst [vmem:[#allocation2 + $0x2a] sm:$0xff] %v515
        %658 = vst [vmem:[#allocation2 + $0x32] sm:$0xff] %v520
        %659 = vst [vmem:[#allocation2 + $0x3a] sm:$0xff] %v525
        %660 = vst [vmem:[#allocation2 + $0x42] sm:$0xff] %v530
        %661 = vst [vmem:[#allocation2 + $0x4a] sm:$0xff] %v535
        %662 = vst [vmem:[#allocation2 + $0x52] sm:$0xff] %v540
        %663 = vst [vmem:[#allocation2 + $0x5a] sm:$0xff] %v545
        %664 = vst [vmem:[#allocation2 + $0x62] sm:$0xff] %v550
        %665 = vst [vmem:[#allocation2 + $0x6a] sm:$0xff] %v555
        %666 = vst [vmem:[#allocation2 + $0x72] sm:$0xff] %v560
        %667 = vst [vmem:[#allocation2 + $0x7a] sm:$0xff] %v565
        %668 = vst [vmem:[#allocation2 + $0x8a] sm:$0xff] %v570
        %669 = vst [vmem:[#allocation2 + $0x92] sm:$0xff] %v575
        %670 = vst [vmem:[#allocation2 + $0x9a] sm:$0xff] %v580
        %671 = vst [vmem:[#allocation2 + $0xa2] sm:$0xff] %v585
        %672 = vst [vmem:[#allocation2 + $0xaa] sm:$0xff] %v590
        %673 = vst [vmem:[#allocation2 + $0xb2] sm:$0xff] %v595
        %674 = vst [vmem:[#allocation2 + $0xba] sm:$0xff] %v600
        %675 = vst [vmem:[#allocation2 + $0xc2] sm:$0xff] %v605
        %676 = vst [vmem:[#allocation2 + $0xca] sm:$0xff] %v610
        %677 = vst [vmem:[#allocation2 + $0xd2] sm:$0xff] %v615
        %678 = vst [vmem:[#allocation2 + $0xda] sm:$0xff] %v620
        %679 = vst [vmem:[#allocation2 + $0xe2] sm:$0xff] %v625
        %680 = vst [vmem:[#allocation2 + $0xea] sm:$0xff] %v630
        %681 = vst [vmem:[#allocation2 + $0xf2] sm:$0xff] %v635
        %682 = vst [vmem:[#allocation2 + $0xfa] sm:$0xff] %v640
        %683 = vst [vmem:[#allocation2 + $0x102] sm:$0xff] %v645
        %v684 = vld [vmem:[#allocation2] sm:$0xff]
        %v685 = vld [vmem:[#allocation2 + $0x8] sm:$0xff]
        %v686 = vld [vmem:[#allocation2 + $0x10] sm:$0xff]
        %v687 = vld [vmem:[#allocation2 + $0x18] sm:$0xff]
        %v688 = vld [vmem:[#allocation2 + $0x20] sm:$0xff]
        %v689 = vld [vmem:[#allocation2 + $0x28] sm:$0xff]
        %v690 = vld [vmem:[#allocation2 + $0x30] sm:$0xff]
        %v691 = vld [vmem:[#allocation2 + $0x38] sm:$0xff]
        %v692 = vld [vmem:[#allocation2 + $0x40] sm:$0xff]
        %v693 = vld [vmem:[#allocation2 + $0x48] sm:$0xff]
        %v694 = vld [vmem:[#allocation2 + $0x50] sm:$0xff]
        %v695 = vld [vmem:[#allocation2 + $0x58] sm:$0xff]
        %v696 = vld [vmem:[#allocation2 + $0x60] sm:$0xff]
        %v697 = vld [vmem:[#allocation2 + $0x68] sm:$0xff]
        %v698 = vld [vmem:[#allocation2 + $0x70] sm:$0xff]
        %v699 = vld [vmem:[#allocation2 + $0x78] sm:$0xff]
        %v700 = vld [vmem:[#allocation2 + $0x88] sm:$0xff]
        %v701 = vld [vmem:[#allocation2 + $0x90] sm:$0xff]
        %v702 = vld [vmem:[#allocation2 + $0x98] sm:$0xff]
        %v703 = vld [vmem:[#allocation2 + $0xa0] sm:$0xff]
        %v704 = vld [vmem:[#allocation2 + $0xa8] sm:$0xff]
        %v705 = vld [vmem:[#allocation2 + $0xb0] sm:$0xff]
        %v706 = vld [vmem:[#allocation2 + $0xb8] sm:$0xff]
        %v707 = vld [vmem:[#allocation2 + $0xc0] sm:$0xff]
        %v708 = vld [vmem:[#allocation2 + $0xc8] sm:$0xff]
        %v709 = vld [vmem:[#allocation2 + $0xd0] sm:$0xff]
        %v710 = vld [vmem:[#allocation2 + $0xd8] sm:$0xff]
        %v711 = vld [vmem:[#allocation2 + $0xe0] sm:$0xff]
        %v712 = vld [vmem:[#allocation2 + $0xe8] sm:$0xff]
        %v713 = vld [vmem:[#allocation2 + $0xf0] sm:$0xff]
        %v714 = vld [vmem:[#allocation2 + $0xf8] sm:$0xff]
        %v715 = vld [vmem:[#allocation2 + $0x100] sm:$0xff]
        %v716 = vld [vmem:[%s3] sm:$0x1]
        %v717 = vlaneseq
        %v718 = vshrl.u32 %v717, 7
        %v719 = vsub.s32 0, %v718
        %v720 = vrot.slane %v716, %v719
        %v721 = vmul.f32 %v684, %v720
        %v722 = vmul.f32 %v685, %v720
        %v723 = vmul.f32 %v686, %v720
        %v724 = vmul.f32 %v687, %v720
        %v725 = vmul.f32 %v688, %v720
        %v726 = vmul.f32 %v689, %v720
        %v727 = vmul.f32 %v690, %v720
        %v728 = vmul.f32 %v691, %v720
        %v729 = vmul.f32 %v692, %v720
        %v730 = vmul.f32 %v693, %v720
        %v731 = vmul.f32 %v694, %v720
        %v732 = vmul.f32 %v695, %v720
        %v733 = vmul.f32 %v696, %v720
        %v734 = vmul.f32 %v697, %v720
        %v735 = vmul.f32 %v698, %v720
        %v736 = vmul.f32 %v699, %v720
        %v737 = vmul.f32 %v700, %v720
        %v738 = vmul.f32 %v701, %v720
        %v739 = vmul.f32 %v702, %v720
        %v740 = vmul.f32 %v703, %v720
        %v741 = vmul.f32 %v704, %v720
        %v742 = vmul.f32 %v705, %v720
        %v743 = vmul.f32 %v706, %v720
        %v744 = vmul.f32 %v707, %v720
        %v745 = vmul.f32 %v708, %v720
        %v746 = vmul.f32 %v709, %v720
        %v747 = vmul.f32 %v710, %v720
        %v748 = vmul.f32 %v711, %v720
        %v749 = vmul.f32 %v712, %v720
        %v750 = vmul.f32 %v713, %v720
        %v751 = vmul.f32 %v714, %v720
        %v752 = vmul.f32 %v715, %v720
        %v753 = vadd.f32 %v490, %v721
        %v754 = vadd.f32 %v495, %v722
        %v755 = vadd.f32 %v500, %v723
        %v756 = vadd.f32 %v505, %v724
        %v757 = vadd.f32 %v510, %v725
        %v758 = vadd.f32 %v515, %v726
        %v759 = vadd.f32 %v520, %v727
        %v760 = vadd.f32 %v525, %v728
        %v761 = vadd.f32 %v530, %v729
        %v762 = vadd.f32 %v535, %v730
        %v763 = vadd.f32 %v540, %v731
        %v764 = vadd.f32 %v545, %v732
        %v765 = vadd.f32 %v550, %v733
        %v766 = vadd.f32 %v555, %v734
        %v767 = vadd.f32 %v560, %v735
        %v768 = vadd.f32 %v565, %v736
        %v769 = vadd.f32 %v570, %v737
        %v770 = vadd.f32 %v575, %v738
        %v771 = vadd.f32 %v580, %v739
        %v772 = vadd.f32 %v585, %v740
        %v773 = vadd.f32 %v590, %v741
        %v774 = vadd.f32 %v595, %v742
        %v775 = vadd.f32 %v600, %v743
        %v776 = vadd.f32 %v605, %v744
        %v777 = vadd.f32 %v610, %v745
        %v778 = vadd.f32 %v615, %v746
        %v779 = vadd.f32 %v620, %v747
        %v780 = vadd.f32 %v625, %v748
        %v781 = vadd.f32 %v630, %v749
        %v782 = vadd.f32 %v635, %v750
        %v783 = vadd.f32 %v640, %v751
        %v784 = vadd.f32 %v645, %v752
        %v785 = vld [vmem:[#allocation2 + $0x1] sm:$0xff]
        %v786 = vld [vmem:[#allocation2 + $0x9] sm:$0xff]
        %v787 = vld [vmem:[#allocation2 + $0x11] sm:$0xff]
        %v788 = vld [vmem:[#allocation2 + $0x19] sm:$0xff]
        %v789 = vld [vmem:[#allocation2 + $0x21] sm:$0xff]
        %v790 = vld [vmem:[#allocation2 + $0x29] sm:$0xff]
        %v791 = vld [vmem:[#allocation2 + $0x31] sm:$0xff]
        %v792 = vld [vmem:[#allocation2 + $0x39] sm:$0xff]
        %v793 = vld [vmem:[#allocation2 + $0x41] sm:$0xff]
        %v794 = vld [vmem:[#allocation2 + $0x49] sm:$0xff]
        %v795 = vld [vmem:[#allocation2 + $0x51] sm:$0xff]
        %v796 = vld [vmem:[#allocation2 + $0x59] sm:$0xff]
        %v797 = vld [vmem:[#allocation2 + $0x61] sm:$0xff]
        %v798 = vld [vmem:[#allocation2 + $0x69] sm:$0xff]
        %v799 = vld [vmem:[#allocation2 + $0x71] sm:$0xff]
        %v800 = vld [vmem:[#allocation2 + $0x79] sm:$0xff]
        %v801 = vld [vmem:[#allocation2 + $0x89] sm:$0xff]
        %v802 = vld [vmem:[#allocation2 + $0x91] sm:$0xff]
        %v803 = vld [vmem:[#allocation2 + $0x99] sm:$0xff]
        %v804 = vld [vmem:[#allocation2 + $0xa1] sm:$0xff]
        %v805 = vld [vmem:[#allocation2 + $0xa9] sm:$0xff]
        %v806 = vld [vmem:[#allocation2 + $0xb1] sm:$0xff]
        %v807 = vld [vmem:[#allocation2 + $0xb9] sm:$0xff]
        %v808 = vld [vmem:[#allocation2 + $0xc1] sm:$0xff]
        %v809 = vld [vmem:[#allocation2 + $0xc9] sm:$0xff]
        %v810 = vld [vmem:[#allocation2 + $0xd1] sm:$0xff]
        %v811 = vld [vmem:[#allocation2 + $0xd9] sm:$0xff]
        %v812 = vld [vmem:[#allocation2 + $0xe1] sm:$0xff]
        %v813 = vld [vmem:[#allocation2 + $0xe9] sm:$0xff]
        %v814 = vld [vmem:[#allocation2 + $0xf1] sm:$0xff]
        %v815 = vld [vmem:[#allocation2 + $0xf9] sm:$0xff]
        %v816 = vld [vmem:[#allocation2 + $0x101] sm:$0xff]
        %v817 = vld [vmem:[%s3 + $0x1] sm:$0x1]
        %v818 = vlaneseq
        %v819 = vshrl.u32 %v818, 7
        %v820 = vsub.s32 0, %v819
        %v821 = vrot.slane %v817, %v820
        %v822 = vmul.f32 %v785, %v821
        %v823 = vmul.f32 %v786, %v821
        %v824 = vmul.f32 %v787, %v821
        %v825 = vmul.f32 %v788, %v821
        %v826 = vmul.f32 %v789, %v821
        %v827 = vmul.f32 %v790, %v821
        %v828 = vmul.f32 %v791, %v821
        %v829 = vmul.f32 %v792, %v821
        %v830 = vmul.f32 %v793, %v821
        %v831 = vmul.f32 %v794, %v821
        %v832 = vmul.f32 %v795, %v821
        %v833 = vmul.f32 %v796, %v821
        %v834 = vmul.f32 %v797, %v821
        %v835 = vmul.f32 %v798, %v821
        %v836 = vmul.f32 %v799, %v821
        %v837 = vmul.f32 %v800, %v821
        %v838 = vmul.f32 %v801, %v821
        %v839 = vmul.f32 %v802, %v821
        %v840 = vmul.f32 %v803, %v821
        %v841 = vmul.f32 %v804, %v821
        %v842 = vmul.f32 %v805, %v821
        %v843 = vmul.f32 %v806, %v821
        %v844 = vmul.f32 %v807, %v821
        %v845 = vmul.f32 %v808, %v821
        %v846 = vmul.f32 %v809, %v821
        %v847 = vmul.f32 %v810, %v821
        %v848 = vmul.f32 %v811, %v821
        %v849 = vmul.f32 %v812, %v821
        %v850 = vmul.f32 %v813, %v821
        %v851 = vmul.f32 %v814, %v821
        %v852 = vmul.f32 %v815, %v821
        %v853 = vmul.f32 %v816, %v821
        %v854 = vadd.f32 %v753, %v822
        %v855 = vadd.f32 %v754, %v823
        %v856 = vadd.f32 %v755, %v824
        %v857 = vadd.f32 %v756, %v825
        %v858 = vadd.f32 %v757, %v826
        %v859 = vadd.f32 %v758, %v827
        %v860 = vadd.f32 %v759, %v828
        %v861 = vadd.f32 %v760, %v829
        %v862 = vadd.f32 %v761, %v830
        %v863 = vadd.f32 %v762, %v831
        %v864 = vadd.f32 %v763, %v832
        %v865 = vadd.f32 %v764, %v833
        %v866 = vadd.f32 %v765, %v834
        %v867 = vadd.f32 %v766, %v835
        %v868 = vadd.f32 %v767, %v836
        %v869 = vadd.f32 %v768, %v837
        %v870 = vadd.f32 %v769, %v838
        %v871 = vadd.f32 %v770, %v839
        %v872 = vadd.f32 %v771, %v840
        %v873 = vadd.f32 %v772, %v841
        %v874 = vadd.f32 %v773, %v842
        %v875 = vadd.f32 %v774, %v843
        %v876 = vadd.f32 %v775, %v844
        %v877 = vadd.f32 %v776, %v845
        %v878 = vadd.f32 %v777, %v846
        %v879 = vadd.f32 %v778, %v847
        %v880 = vadd.f32 %v779, %v848
        %v881 = vadd.f32 %v780, %v849
        %v882 = vadd.f32 %v781, %v850
        %v883 = vadd.f32 %v782, %v851
        %v884 = vadd.f32 %v783, %v852
        %v885 = vadd.f32 %v784, %v853
        %v886 = vld [vmem:[%s3 + $0x2] sm:$0x1]
        %v887 = vlaneseq
        %v888 = vshrl.u32 %v887, 7
        %v889 = vsub.s32 0, %v888
        %v890 = vrot.slane %v886, %v889
        %v891 = vmul.f32 %v490, %v890
        %v892 = vmul.f32 %v495, %v890
        %v893 = vmul.f32 %v500, %v890
        %v894 = vmul.f32 %v505, %v890
        %v895 = vmul.f32 %v510, %v890
        %v896 = vmul.f32 %v515, %v890
        %v897 = vmul.f32 %v520, %v890
        %v898 = vmul.f32 %v525, %v890
        %v899 = vmul.f32 %v530, %v890
        %v900 = vmul.f32 %v535, %v890
        %v901 = vmul.f32 %v540, %v890
        %v902 = vmul.f32 %v545, %v890
        %v903 = vmul.f32 %v550, %v890
        %v904 = vmul.f32 %v555, %v890
        %v905 = vmul.f32 %v560, %v890
        %v906 = vmul.f32 %v565, %v890
        %v907 = vmul.f32 %v570, %v890
        %v908 = vmul.f32 %v575, %v890
        %v909 = vmul.f32 %v580, %v890
        %v910 = vmul.f32 %v585, %v890
        %v911 = vmul.f32 %v590, %v890
        %v912 = vmul.f32 %v595, %v890
        %v913 = vmul.f32 %v600, %v890
        %v914 = vmul.f32 %v605, %v890
        %v915 = vmul.f32 %v610, %v890
        %v916 = vmul.f32 %v615, %v890
        %v917 = vmul.f32 %v620, %v890
        %v918 = vmul.f32 %v625, %v890
        %v919 = vmul.f32 %v630, %v890
        %v920 = vmul.f32 %v635, %v890
        %v921 = vmul.f32 %v640, %v890
        %v922 = vmul.f32 %v645, %v890
        %v923 = vadd.f32 %v854, %v891
        %v924 = vadd.f32 %v855, %v892
        %v925 = vadd.f32 %v856, %v893
        %v926 = vadd.f32 %v857, %v894
        %v927 = vadd.f32 %v858, %v895
        %v928 = vadd.f32 %v859, %v896
        %v929 = vadd.f32 %v860, %v897
        %v930 = vadd.f32 %v861, %v898
        %v931 = vadd.f32 %v862, %v899
        %v932 = vadd.f32 %v863, %v900
        %v933 = vadd.f32 %v864, %v901
        %v934 = vadd.f32 %v865, %v902
        %v935 = vadd.f32 %v866, %v903
        %v936 = vadd.f32 %v867, %v904
        %v937 = vadd.f32 %v868, %v905
        %v938 = vadd.f32 %v869, %v906
        %v939 = vadd.f32 %v870, %v907
        %v940 = vadd.f32 %v871, %v908
        %v941 = vadd.f32 %v872, %v909
        %v942 = vadd.f32 %v873, %v910
        %v943 = vadd.f32 %v874, %v911
        %v944 = vadd.f32 %v875, %v912
        %v945 = vadd.f32 %v876, %v913
        %v946 = vadd.f32 %v877, %v914
        %v947 = vadd.f32 %v878, %v915
        %v948 = vadd.f32 %v879, %v916
        %v949 = vadd.f32 %v880, %v917
        %v950 = vadd.f32 %v881, %v918
        %v951 = vadd.f32 %v882, %v919
        %v952 = vadd.f32 %v883, %v920
        %v953 = vadd.f32 %v884, %v921
        %v954 = vadd.f32 %v885, %v922
        %v955 = vld [vmem:[#allocation2 + $0x4] sm:$0xff]
        %v956 = vld [vmem:[#allocation2 + $0xc] sm:$0xff]
        %v957 = vld [vmem:[#allocation2 + $0x14] sm:$0xff]
        %v958 = vld [vmem:[#allocation2 + $0x1c] sm:$0xff]
        %v959 = vld [vmem:[#allocation2 + $0x24] sm:$0xff]
        %v960 = vld [vmem:[#allocation2 + $0x2c] sm:$0xff]
        %v961 = vld [vmem:[#allocation2 + $0x34] sm:$0xff]
        %v962 = vld [vmem:[#allocation2 + $0x3c] sm:$0xff]
        %v963 = vld [vmem:[#allocation2 + $0x44] sm:$0xff]
        %v964 = vld [vmem:[#allocation2 + $0x4c] sm:$0xff]
        %v965 = vld [vmem:[#allocation2 + $0x54] sm:$0xff]
        %v966 = vld [vmem:[#allocation2 + $0x5c] sm:$0xff]
        %v967 = vld [vmem:[#allocation2 + $0x64] sm:$0xff]
        %v968 = vld [vmem:[#allocation2 + $0x6c] sm:$0xff]
        %v969 = vld [vmem:[#allocation2 + $0x74] sm:$0xff]
        %v970 = vld [vmem:[#allocation2 + $0x7c] sm:$0xff]
        %v971 = vld [vmem:[#allocation2 + $0x8c] sm:$0xff]
        %v972 = vld [vmem:[#allocation2 + $0x94] sm:$0xff]
        %v973 = vld [vmem:[#allocation2 + $0x9c] sm:$0xff]
        %v974 = vld [vmem:[#allocation2 + $0xa4] sm:$0xff]
        %v975 = vld [vmem:[#allocation2 + $0xac] sm:$0xff]
        %v976 = vld [vmem:[#allocation2 + $0xb4] sm:$0xff]
        %v977 = vld [vmem:[#allocation2 + $0xbc] sm:$0xff]
        %v978 = vld [vmem:[#allocation2 + $0xc4] sm:$0xff]
        %v979 = vld [vmem:[#allocation2 + $0xcc] sm:$0xff]
        %v980 = vld [vmem:[#allocation2 + $0xd4] sm:$0xff]
        %v981 = vld [vmem:[#allocation2 + $0xdc] sm:$0xff]
        %v982 = vld [vmem:[#allocation2 + $0xe4] sm:$0xff]
        %v983 = vld [vmem:[#allocation2 + $0xec] sm:$0xff]
        %v984 = vld [vmem:[#allocation2 + $0xf4] sm:$0xff]
        %v985 = vld [vmem:[#allocation2 + $0xfc] sm:$0xff]
        %v986 = vld [vmem:[#allocation2 + $0x104] sm:$0xff]
        %v987 = vld [vmem:[%s4] sm:$0x1]
        %v989 = vlaneseq
        %v990 = vshrl.u32 %v989, 7
        %v991 = vsub.s32 0, %v990
        %v992 = vrot.slane %v987, %v991
        %v994 = vmul.f32 %v955, %v992
        %v995 = vmul.f32 %v956, %v992
        %v996 = vmul.f32 %v957, %v992
        %v997 = vmul.f32 %v958, %v992
        %v998 = vmul.f32 %v959, %v992
        %v999 = vmul.f32 %v960, %v992
        %v1000 = vmul.f32 %v961, %v992
        %v1001 = vmul.f32 %v962, %v992
        %v1002 = vmul.f32 %v963, %v992
        %v1003 = vmul.f32 %v964, %v992
        %v1004 = vmul.f32 %v965, %v992
        %v1005 = vmul.f32 %v966, %v992
        %v1006 = vmul.f32 %v967, %v992
        %v1007 = vmul.f32 %v968, %v992
        %v1008 = vmul.f32 %v969, %v992
        %v1009 = vmul.f32 %v970, %v992
        %v1010 = vmul.f32 %v971, %v992
        %v1011 = vmul.f32 %v972, %v992
        %v1012 = vmul.f32 %v973, %v992
        %v1013 = vmul.f32 %v974, %v992
        %v1014 = vmul.f32 %v975, %v992
        %v1015 = vmul.f32 %v976, %v992
        %v1016 = vmul.f32 %v977, %v992
        %v1017 = vmul.f32 %v978, %v992
        %v1018 = vmul.f32 %v979, %v992
        %v1019 = vmul.f32 %v980, %v992
        %v1020 = vmul.f32 %v981, %v992
        %v1021 = vmul.f32 %v982, %v992
        %v1022 = vmul.f32 %v983, %v992
        %v1023 = vmul.f32 %v984, %v992
        %v1024 = vmul.f32 %v985, %v992
        %v1025 = vmul.f32 %v986, %v992
        %v1026 = vadd.f32 %v923, %v994
        %v1027 = vadd.f32 %v924, %v995
        %v1028 = vadd.f32 %v925, %v996
        %v1029 = vadd.f32 %v926, %v997
        %v1030 = vadd.f32 %v927, %v998
        %v1031 = vadd.f32 %v928, %v999
        %v1032 = vadd.f32 %v929, %v1000
        %v1033 = vadd.f32 %v930, %v1001
        %v1034 = vadd.f32 %v931, %v1002
        %v1035 = vadd.f32 %v932, %v1003
        %v1036 = vadd.f32 %v933, %v1004
        %v1037 = vadd.f32 %v934, %v1005
        %v1038 = vadd.f32 %v935, %v1006
        %v1039 = vadd.f32 %v936, %v1007
        %v1040 = vadd.f32 %v937, %v1008
        %v1041 = vadd.f32 %v938, %v1009
        %v1042 = vadd.f32 %v939, %v1010
        %v1043 = vadd.f32 %v940, %v1011
        %v1044 = vadd.f32 %v941, %v1012
        %v1045 = vadd.f32 %v942, %v1013
        %v1046 = vadd.f32 %v943, %v1014
        %v1047 = vadd.f32 %v944, %v1015
        %v1048 = vadd.f32 %v945, %v1016
        %v1049 = vadd.f32 %v946, %v1017
        %v1050 = vadd.f32 %v947, %v1018
        %v1051 = vadd.f32 %v948, %v1019
        %v1052 = vadd.f32 %v949, %v1020
        %v1053 = vadd.f32 %v950, %v1021
        %v1054 = vadd.f32 %v951, %v1022
        %v1055 = vadd.f32 %v952, %v1023
        %v1056 = vadd.f32 %v953, %v1024
        %v1057 = vadd.f32 %v954, %v1025
        %1058 = vxpose.xlu0.b32.start [1/16] %v1026, 128
        %1059 = vxpose.xlu0.b32.cont [2/16] %v1027, 128
        %1060 = vxpose.xlu0.b32.cont [3/16] %v1028, 128
        %1061 = vxpose.xlu0.b32.cont [4/16] %v1029, 128
        %1062 = vxpose.xlu0.b32.cont [5/16] %v1030, 128
        %1063 = vxpose.xlu0.b32.cont [6/16] %v1031, 128
        %1064 = vxpose.xlu0.b32.cont [7/16] %v1032, 128
        %1065 = vxpose.xlu0.b32.cont [8/16] %v1033, 128
        %1066 = vxpose.xlu0.b32.cont [9/16] %v1034, 128
        %1067 = vxpose.xlu0.b32.cont [10/16] %v1035, 128
        %1068 = vxpose.xlu0.b32.cont [11/16] %v1036, 128
        %1069 = vxpose.xlu0.b32.cont [12/16] %v1037, 128
        %1070 = vxpose.xlu0.b32.cont [13/16] %v1038, 128
        %1071 = vxpose.xlu0.b32.cont [14/16] %v1039, 128
        %1072 = vxpose.xlu0.b32.cont [15/16] %v1040, 128
        %1073 = vxpose.xlu0.b32.end [16/16] %v1041, 128
        %v1074 = vpop.trf.xlu0
        %v1075 = vpop.trf.xlu0
        %v1076 = vpop.trf.xlu0
        %v1077 = vpop.trf.xlu0
        %v1078 = vpop.trf.xlu0
        %v1079 = vpop.trf.xlu0
        %v1080 = vpop.trf.xlu0
        %v1081 = vpop.trf.xlu0
        %v1082 = vpop.trf.xlu0
        %v1083 = vpop.trf.xlu0
        %v1084 = vpop.trf.xlu0
        %v1085 = vpop.trf.xlu0
        %v1086 = vpop.trf.xlu0
        %v1087 = vpop.trf.xlu0
        %v1088 = vpop.trf.xlu0
        %v1089 = vpop.trf.xlu0
        %1090 = vst [vmem:[%s364] sm:$0xff] %v1074
        %1091 = vst [vmem:[%s364 + $0x8] sm:$0xff] %v1075
        %1092 = vst [vmem:[%s364 + $0x10] sm:$0xff] %v1076
        %1093 = vst [vmem:[%s364 + $0x18] sm:$0xff] %v1077
        %1094 = vst [vmem:[%s364 + $0x20] sm:$0xff] %v1078
        %1095 = vst [vmem:[%s364 + $0x28] sm:$0xff] %v1079
        %1096 = vst [vmem:[%s364 + $0x30] sm:$0xff] %v1080
        %1097 = vst [vmem:[%s364 + $0x38] sm:$0xff] %v1081
        %1098 = vst [vmem:[%s364 + $0x40] sm:$0xff] %v1082
        %1099 = vst [vmem:[%s364 + $0x48] sm:$0xff] %v1083
        %1100 = vst [vmem:[%s364 + $0x50] sm:$0xff] %v1084
        %1101 = vst [vmem:[%s364 + $0x58] sm:$0xff] %v1085
        %1102 = vst [vmem:[%s364 + $0x60] sm:$0xff] %v1086
        %1103 = vst [vmem:[%s364 + $0x68] sm:$0xff] %v1087
        %1104 = vst [vmem:[%s364 + $0x70] sm:$0xff] %v1088
        %1105 = vst [vmem:[%s364 + $0x78] sm:$0xff] %v1089
        %1106 = vxpose.xlu0.b32.start [1/16] %v1042, 128
        %1107 = vxpose.xlu0.b32.cont [2/16] %v1043, 128
        %1108 = vxpose.xlu0.b32.cont [3/16] %v1044, 128
        %1109 = vxpose.xlu0.b32.cont [4/16] %v1045, 128
        %1110 = vxpose.xlu0.b32.cont [5/16] %v1046, 128
        %1111 = vxpose.xlu0.b32.cont [6/16] %v1047, 128
        %1112 = vxpose.xlu0.b32.cont [7/16] %v1048, 128
        %1113 = vxpose.xlu0.b32.cont [8/16] %v1049, 128
        %1114 = vxpose.xlu0.b32.cont [9/16] %v1050, 128
        %1115 = vxpose.xlu0.b32.cont [10/16] %v1051, 128
        %1116 = vxpose.xlu0.b32.cont [11/16] %v1052, 128
        %1117 = vxpose.xlu0.b32.cont [12/16] %v1053, 128
        %1118 = vxpose.xlu0.b32.cont [13/16] %v1054, 128
        %1119 = vxpose.xlu0.b32.cont [14/16] %v1055, 128
        %1120 = vxpose.xlu0.b32.cont [15/16] %v1056, 128
        %1121 = vxpose.xlu0.b32.end [16/16] %v1057, 128
        %v1122 = vpop.trf.xlu0
        %v1123 = vpop.trf.xlu0
        %v1124 = vpop.trf.xlu0
        %v1125 = vpop.trf.xlu0
        %v1126 = vpop.trf.xlu0
        %v1127 = vpop.trf.xlu0
        %v1128 = vpop.trf.xlu0
        %v1129 = vpop.trf.xlu0
        %v1130 = vpop.trf.xlu0
        %v1131 = vpop.trf.xlu0
        %v1132 = vpop.trf.xlu0
        %v1133 = vpop.trf.xlu0
        %v1134 = vpop.trf.xlu0
        %v1135 = vpop.trf.xlu0
        %v1136 = vpop.trf.xlu0
        %v1137 = vpop.trf.xlu0
        %s1138 = scalar_lea.vmem %s364, 128 [#allocation10]
        %1139 = vst [vmem:[%s1138] sm:$0xff] %v1122
        %1140 = vst [vmem:[%s1138 + $0x8] sm:$0xff] %v1123
        %1141 = vst [vmem:[%s1138 + $0x10] sm:$0xff] %v1124
        %1142 = vst [vmem:[%s1138 + $0x18] sm:$0xff] %v1125
        %1143 = vst [vmem:[%s1138 + $0x20] sm:$0xff] %v1126
        %1144 = vst [vmem:[%s1138 + $0x28] sm:$0xff] %v1127
        %1145 = vst [vmem:[%s1138 + $0x30] sm:$0xff] %v1128
        %1146 = vst [vmem:[%s1138 + $0x38] sm:$0xff] %v1129
        %1147 = vst [vmem:[%s1138 + $0x40] sm:$0xff] %v1130
        %1148 = vst [vmem:[%s1138 + $0x48] sm:$0xff] %v1131
        %1149 = vst [vmem:[%s1138 + $0x50] sm:$0xff] %v1132
        %1150 = vst [vmem:[%s1138 + $0x58] sm:$0xff] %v1133
        %1151 = vst [vmem:[%s1138 + $0x60] sm:$0xff] %v1134
        %1152 = vst [vmem:[%s1138 + $0x68] sm:$0xff] %v1135
        %1153 = vst [vmem:[%s1138 + $0x70] sm:$0xff] %v1136
        %1154 = vst [vmem:[%s1138 + $0x78] sm:$0xff] %v1137
        %v1155 = vld [vmem:[#allocation8] sm:$0xff]
        %v1156 = vld [vmem:[#allocation8 + $0x8] sm:$0xff]
        %v1157 = vld [vmem:[#allocation8 + $0x10] sm:$0xff]
        %v1158 = vld [vmem:[#allocation8 + $0x18] sm:$0xff]
        %v1159 = vld [vmem:[#allocation8 + $0x20] sm:$0xff]
        %v1160 = vld [vmem:[#allocation8 + $0x28] sm:$0xff]
        %v1161 = vld [vmem:[#allocation8 + $0x30] sm:$0xff]
        %v1162 = vld [vmem:[#allocation8 + $0x38] sm:$0xff]
        %v1163 = vld [vmem:[#allocation8 + $0x40] sm:$0xff]
        %v1164 = vld [vmem:[#allocation8 + $0x48] sm:$0xff]
        %v1165 = vld [vmem:[#allocation8 + $0x50] sm:$0xff]
        %v1166 = vld [vmem:[#allocation8 + $0x58] sm:$0xff]
        %v1167 = vld [vmem:[#allocation8 + $0x60] sm:$0xff]
        %v1168 = vld [vmem:[#allocation8 + $0x68] sm:$0xff]
        %v1169 = vld [vmem:[#allocation8 + $0x70] sm:$0xff]
        %v1170 = vld [vmem:[#allocation8 + $0x78] sm:$0xff]
        %v1171 = vld [vmem:[%s6] sm:$0x1]
        %v1173 = vlaneseq
        %v1174 = vshrl.u32 %v1173, 7
        %v1175 = vsub.s32 0, %v1174
        %v1176 = vrot.slane %v1171, %v1175
        %1178 = vmatprep.subr.mxu0 0.0
        %1179 = vmatpush1.msra.mxu0 %v1170
        %1180 = vmatprep.subr.mxu0 0.0
        %1181 = vmatpush1.msra.mxu0 %v1169
        %1182 = vmatprep.subr.mxu0 0.0
        %1183 = vmatpush1.msra.mxu0 %v1168
        %1184 = vmatprep.subr.mxu0 0.0
        %1185 = vmatpush1.msra.mxu0 %v1167
        %1186 = vmatprep.subr.mxu0 0.0
        %1187 = vmatpush1.msra.mxu0 %v1166
        %1188 = vmatprep.subr.mxu0 0.0
        %1189 = vmatpush1.msra.mxu0 %v1165
        %1190 = vmatprep.subr.mxu0 0.0
        %1191 = vmatpush1.msra.mxu0 %v1164
        %1192 = vmatprep.subr.mxu0 0.0
        %1193 = vmatpush1.msra.mxu0 %v1163
        %1194 = vmatprep.subr.mxu0 0.0
        %1195 = vmatpush1.msra.mxu0 %v1162
        %1196 = vmatprep.subr.mxu0 0.0
        %1197 = vmatpush1.msra.mxu0 %v1161
        %1198 = vmatprep.subr.mxu0 0.0
        %1199 = vmatpush1.msra.mxu0 %v1160
        %1200 = vmatprep.subr.mxu0 0.0
        %1201 = vmatpush1.msra.mxu0 %v1159
        %1202 = vmatprep.subr.mxu0 0.0
        %1203 = vmatpush1.msra.mxu0 %v1158
        %1204 = vmatprep.subr.mxu0 0.0
        %1205 = vmatpush1.msra.mxu0 %v1157
        %1206 = vmatprep.subr.mxu0 0.0
        %1207 = vmatpush1.msra.mxu0 %v1156
        %1208 = vmatprep.subr.mxu0 0.0
        %1209 = vmatpush1.msra.mxu0 %v1155
        %1210 = vmatprep.subr.mxu0 0.0
        %1211 = vmatpush2.msra.mxu0 0.0
        %1212 = vmatprep.subr.mxu0 0.0
        %1213 = vmatpush2.msra.mxu0 0.0
        %1214 = vmatprep.subr.mxu0 0.0
        %1215 = vmatpush2.msra.mxu0 0.0
        %1216 = vmatprep.subr.mxu0 0.0
        %1217 = vmatpush2.msra.mxu0 0.0
        %1218 = vmatprep.subr.mxu0 0.0
        %1219 = vmatpush2.msra.mxu0 0.0
        %1220 = vmatprep.subr.mxu0 0.0
        %1221 = vmatpush2.msra.mxu0 0.0
        %1222 = vmatprep.subr.mxu0 0.0
        %1223 = vmatpush2.msra.mxu0 0.0
        %1224 = vmatprep.subr.mxu0 0.0
        %1225 = vmatpush2.msra.mxu0 0.0
        %1226 = vmatprep.subr.mxu0 0.0
        %1227 = vmatpush2.msra.mxu0 0.0
        %1228 = vmatprep.subr.mxu0 0.0
        %1229 = vmatpush2.msra.mxu0 0.0
        %1230 = vmatprep.subr.mxu0 0.0
        %1231 = vmatpush2.msra.mxu0 0.0
        %1232 = vmatprep.subr.mxu0 0.0
        %1233 = vmatpush2.msra.mxu0 0.0
        %1234 = vmatprep.subr.mxu0 0.0
        %1235 = vmatpush2.msra.mxu0 0.0
        %1236 = vmatprep.subr.mxu0 0.0
        %1237 = vmatpush2.msra.mxu0 0.0
        %1238 = vmatprep.subr.mxu0 0.0
        %1239 = vmatpush2.msra.mxu0 0.0
        %1240 = vmatprep.subr.mxu0 0.0
        %1241 = vmatpush2.msra.mxu0 0.0
        %1242 = vmatprep.mubr.f32.mxu0 0.0
        %1243 = vmatmul.mubr.f32.gmra.mxu0 %v1026
        %v1244 = vpop.f32.mrf.mxu0
        %v1245 = vadd.f32 %v1176, %v1244
        %v1246 = vpop.f32.mrf.mxu0
        %1247 = vmatprep.mubr.f32.mxu0 0.0
        %1248 = vmatmul.mubr.f32.gmra.mxu0 %v1027
        %v1249 = vpop.f32.mrf.mxu0
        %v1250 = vadd.f32 %v1176, %v1249
        %v1251 = vpop.f32.mrf.mxu0
        %1252 = vmatprep.mubr.f32.mxu0 0.0
        %1253 = vmatmul.mubr.f32.gmra.mxu0 %v1028
        %v1254 = vpop.f32.mrf.mxu0
        %v1255 = vadd.f32 %v1176, %v1254
        %v1256 = vpop.f32.mrf.mxu0
        %1257 = vmatprep.mubr.f32.mxu0 0.0
        %1258 = vmatmul.mubr.f32.gmra.mxu0 %v1029
        %v1259 = vpop.f32.mrf.mxu0
        %v1260 = vadd.f32 %v1176, %v1259
        %v1261 = vpop.f32.mrf.mxu0
        %1262 = vmatprep.mubr.f32.mxu0 0.0
        %1263 = vmatmul.mubr.f32.gmra.mxu0 %v1030
        %v1264 = vpop.f32.mrf.mxu0
        %v1265 = vadd.f32 %v1176, %v1264
        %v1266 = vpop.f32.mrf.mxu0
        %1267 = vmatprep.mubr.f32.mxu0 0.0
        %1268 = vmatmul.mubr.f32.gmra.mxu0 %v1031
        %v1269 = vpop.f32.mrf.mxu0
        %v1270 = vadd.f32 %v1176, %v1269
        %v1271 = vpop.f32.mrf.mxu0
        %1272 = vmatprep.mubr.f32.mxu0 0.0
        %1273 = vmatmul.mubr.f32.gmra.mxu0 %v1032
        %v1274 = vpop.f32.mrf.mxu0
        %v1275 = vadd.f32 %v1176, %v1274
        %v1276 = vpop.f32.mrf.mxu0
        %1277 = vmatprep.mubr.f32.mxu0 0.0
        %1278 = vmatmul.mubr.f32.gmra.mxu0 %v1033
        %v1279 = vpop.f32.mrf.mxu0
        %v1280 = vadd.f32 %v1176, %v1279
        %v1281 = vpop.f32.mrf.mxu0
        %1282 = vmatprep.mubr.f32.mxu0 0.0
        %1283 = vmatmul.mubr.f32.gmra.mxu0 %v1034
        %v1284 = vpop.f32.mrf.mxu0
        %v1285 = vadd.f32 %v1176, %v1284
        %v1286 = vpop.f32.mrf.mxu0
        %1287 = vmatprep.mubr.f32.mxu0 0.0
        %1288 = vmatmul.mubr.f32.gmra.mxu0 %v1035
        %v1289 = vpop.f32.mrf.mxu0
        %v1290 = vadd.f32 %v1176, %v1289
        %v1291 = vpop.f32.mrf.mxu0
        %1292 = vmatprep.mubr.f32.mxu0 0.0
        %1293 = vmatmul.mubr.f32.gmra.mxu0 %v1036
        %v1294 = vpop.f32.mrf.mxu0
        %v1295 = vadd.f32 %v1176, %v1294
        %v1296 = vpop.f32.mrf.mxu0
        %1297 = vmatprep.mubr.f32.mxu0 0.0
        %1298 = vmatmul.mubr.f32.gmra.mxu0 %v1037
        %v1299 = vpop.f32.mrf.mxu0
        %v1300 = vadd.f32 %v1176, %v1299
        %v1301 = vpop.f32.mrf.mxu0
        %1302 = vmatprep.mubr.f32.mxu0 0.0
        %1303 = vmatmul.mubr.f32.gmra.mxu0 %v1038
        %v1304 = vpop.f32.mrf.mxu0
        %v1305 = vadd.f32 %v1176, %v1304
        %v1306 = vpop.f32.mrf.mxu0
        %1307 = vmatprep.mubr.f32.mxu0 0.0
        %1308 = vmatmul.mubr.f32.gmra.mxu0 %v1039
        %v1309 = vpop.f32.mrf.mxu0
        %v1310 = vadd.f32 %v1176, %v1309
        %v1311 = vpop.f32.mrf.mxu0
        %1312 = vmatprep.mubr.f32.mxu0 0.0
        %1313 = vmatmul.mubr.f32.gmra.mxu0 %v1040
        %v1314 = vpop.f32.mrf.mxu0
        %v1315 = vadd.f32 %v1176, %v1314
        %v1316 = vpop.f32.mrf.mxu0
        %1317 = vmatprep.mubr.f32.mxu0 0.0
        %1318 = vmatmul.mubr.f32.gmra.mxu0 %v1041
        %v1319 = vpop.f32.mrf.mxu0
        %v1320 = vadd.f32 %v1176, %v1319
        %v1321 = vpop.f32.mrf.mxu0
        %1322 = vmatprep.mubr.f32.mxu0 0.0
        %1323 = vmatmul.mubr.f32.gmra.mxu0 %v1042
        %v1324 = vpop.f32.mrf.mxu0
        %v1325 = vadd.f32 %v1176, %v1324
        %v1326 = vpop.f32.mrf.mxu0
        %1327 = vmatprep.mubr.f32.mxu0 0.0
        %1328 = vmatmul.mubr.f32.gmra.mxu0 %v1043
        %v1329 = vpop.f32.mrf.mxu0
        %v1330 = vadd.f32 %v1176, %v1329
        %v1331 = vpop.f32.mrf.mxu0
        %1332 = vmatprep.mubr.f32.mxu0 0.0
        %1333 = vmatmul.mubr.f32.gmra.mxu0 %v1044
        %v1334 = vpop.f32.mrf.mxu0
        %v1335 = vadd.f32 %v1176, %v1334
        %v1336 = vpop.f32.mrf.mxu0
        %1337 = vmatprep.mubr.f32.mxu0 0.0
        %1338 = vmatmul.mubr.f32.gmra.mxu0 %v1045
        %v1339 = vpop.f32.mrf.mxu0
        %v1340 = vadd.f32 %v1176, %v1339
        %v1341 = vpop.f32.mrf.mxu0
        %1342 = vmatprep.mubr.f32.mxu0 0.0
        %1343 = vmatmul.mubr.f32.gmra.mxu0 %v1046
        %v1344 = vpop.f32.mrf.mxu0
        %v1345 = vadd.f32 %v1176, %v1344
        %v1346 = vpop.f32.mrf.mxu0
        %1347 = vmatprep.mubr.f32.mxu0 0.0
        %1348 = vmatmul.mubr.f32.gmra.mxu0 %v1047
        %v1349 = vpop.f32.mrf.mxu0
        %v1350 = vadd.f32 %v1176, %v1349
        %v1351 = vpop.f32.mrf.mxu0
        %1352 = vmatprep.mubr.f32.mxu0 0.0
        %1353 = vmatmul.mubr.f32.gmra.mxu0 %v1048
        %v1354 = vpop.f32.mrf.mxu0
        %v1355 = vadd.f32 %v1176, %v1354
        %v1356 = vpop.f32.mrf.mxu0
        %1357 = vmatprep.mubr.f32.mxu0 0.0
        %1358 = vmatmul.mubr.f32.gmra.mxu0 %v1049
        %v1359 = vpop.f32.mrf.mxu0
        %v1360 = vadd.f32 %v1176, %v1359
        %v1361 = vpop.f32.mrf.mxu0
        %1362 = vmatprep.mubr.f32.mxu0 0.0
        %1363 = vmatmul.mubr.f32.gmra.mxu0 %v1050
        %v1364 = vpop.f32.mrf.mxu0
        %v1365 = vadd.f32 %v1176, %v1364
        %v1366 = vpop.f32.mrf.mxu0
        %1367 = vmatprep.mubr.f32.mxu0 0.0
        %1368 = vmatmul.mubr.f32.gmra.mxu0 %v1051
        %v1369 = vpop.f32.mrf.mxu0
        %v1370 = vadd.f32 %v1176, %v1369
        %v1371 = vpop.f32.mrf.mxu0
        %1372 = vmatprep.mubr.f32.mxu0 0.0
        %1373 = vmatmul.mubr.f32.gmra.mxu0 %v1052
        %v1374 = vpop.f32.mrf.mxu0
        %v1375 = vadd.f32 %v1176, %v1374
        %v1376 = vpop.f32.mrf.mxu0
        %1377 = vmatprep.mubr.f32.mxu0 0.0
        %1378 = vmatmul.mubr.f32.gmra.mxu0 %v1053
        %v1379 = vpop.f32.mrf.mxu0
        %v1380 = vadd.f32 %v1176, %v1379
        %v1381 = vpop.f32.mrf.mxu0
        %1382 = vmatprep.mubr.f32.mxu0 0.0
        %1383 = vmatmul.mubr.f32.gmra.mxu0 %v1054
        %v1384 = vpop.f32.mrf.mxu0
        %v1385 = vadd.f32 %v1176, %v1384
        %v1386 = vpop.f32.mrf.mxu0
        %1387 = vmatprep.mubr.f32.mxu0 0.0
        %1388 = vmatmul.mubr.f32.gmra.mxu0 %v1055
        %v1389 = vpop.f32.mrf.mxu0
        %v1390 = vadd.f32 %v1176, %v1389
        %v1391 = vpop.f32.mrf.mxu0
        %1392 = vmatprep.mubr.f32.mxu0 0.0
        %1393 = vmatmul.mubr.f32.gmra.mxu0 %v1056
        %v1394 = vpop.f32.mrf.mxu0
        %v1395 = vadd.f32 %v1176, %v1394
        %v1396 = vpop.f32.mrf.mxu0
        %1397 = vmatprep.mubr.f32.mxu0 0.0
        %1398 = vmatmul.mubr.f32.gmra.mxu0 %v1057
        %v1399 = vpop.f32.mrf.mxu0
        %v1400 = vadd.f32 %v1176, %v1399
        %v1401 = vpop.f32.mrf.mxu0
        %1402 = vdwg.mxu0
        %v1403 = vmax.f32 %v1245, 0.0
        %v1404 = vmax.f32 %v1250, 0.0
        %v1405 = vmax.f32 %v1255, 0.0
        %v1406 = vmax.f32 %v1260, 0.0
        %v1407 = vmax.f32 %v1265, 0.0
        %v1408 = vmax.f32 %v1270, 0.0
        %v1409 = vmax.f32 %v1275, 0.0
        %v1410 = vmax.f32 %v1280, 0.0
        %v1411 = vmax.f32 %v1285, 0.0
        %v1412 = vmax.f32 %v1290, 0.0
        %v1413 = vmax.f32 %v1295, 0.0
        %v1414 = vmax.f32 %v1300, 0.0
        %v1415 = vmax.f32 %v1305, 0.0
        %v1416 = vmax.f32 %v1310, 0.0
        %v1417 = vmax.f32 %v1315, 0.0
        %v1418 = vmax.f32 %v1320, 0.0
        %v1419 = vmax.f32 %v1325, 0.0
        %v1420 = vmax.f32 %v1330, 0.0
        %v1421 = vmax.f32 %v1335, 0.0
        %v1422 = vmax.f32 %v1340, 0.0
        %v1423 = vmax.f32 %v1345, 0.0
        %v1424 = vmax.f32 %v1350, 0.0
        %v1425 = vmax.f32 %v1355, 0.0
        %v1426 = vmax.f32 %v1360, 0.0
        %v1427 = vmax.f32 %v1365, 0.0
        %v1428 = vmax.f32 %v1370, 0.0
        %v1429 = vmax.f32 %v1375, 0.0
        %v1430 = vmax.f32 %v1380, 0.0
        %v1431 = vmax.f32 %v1385, 0.0
        %v1432 = vmax.f32 %v1390, 0.0
        %v1433 = vmax.f32 %v1395, 0.0
        %v1434 = vmax.f32 %v1400, 0.0
        %1435 = vst [vmem:[%s357] sm:$0xff] %v1403
        %1436 = vst [vmem:[%s357 + $0x8] sm:$0xff] %v1404
        %1437 = vst [vmem:[%s357 + $0x10] sm:$0xff] %v1405
        %1438 = vst [vmem:[%s357 + $0x18] sm:$0xff] %v1406
        %1439 = vst [vmem:[%s357 + $0x20] sm:$0xff] %v1407
        %1440 = vst [vmem:[%s357 + $0x28] sm:$0xff] %v1408
        %1441 = vst [vmem:[%s357 + $0x30] sm:$0xff] %v1409
        %1442 = vst [vmem:[%s357 + $0x38] sm:$0xff] %v1410
        %1443 = vst [vmem:[%s357 + $0x40] sm:$0xff] %v1411
        %1444 = vst [vmem:[%s357 + $0x48] sm:$0xff] %v1412
        %1445 = vst [vmem:[%s357 + $0x50] sm:$0xff] %v1413
        %1446 = vst [vmem:[%s357 + $0x58] sm:$0xff] %v1414
        %1447 = vst [vmem:[%s357 + $0x60] sm:$0xff] %v1415
        %1448 = vst [vmem:[%s357 + $0x68] sm:$0xff] %v1416
        %1449 = vst [vmem:[%s357 + $0x70] sm:$0xff] %v1417
        %1450 = vst [vmem:[%s357 + $0x78] sm:$0xff] %v1418
        %1451 = vst [vmem:[%s357 + $0x80] sm:$0xff] %v1419
        %1452 = vst [vmem:[%s357 + $0x88] sm:$0xff] %v1420
        %1453 = vst [vmem:[%s357 + $0x90] sm:$0xff] %v1421
        %1454 = vst [vmem:[%s357 + $0x98] sm:$0xff] %v1422
        %1455 = vst [vmem:[%s357 + $0xa0] sm:$0xff] %v1423
        %1456 = vst [vmem:[%s357 + $0xa8] sm:$0xff] %v1424
        %1457 = vst [vmem:[%s357 + $0xb0] sm:$0xff] %v1425
        %1458 = vst [vmem:[%s357 + $0xb8] sm:$0xff] %v1426
        %1459 = vst [vmem:[%s357 + $0xc0] sm:$0xff] %v1427
        %1460 = vst [vmem:[%s357 + $0xc8] sm:$0xff] %v1428
        %1461 = vst [vmem:[%s357 + $0xd0] sm:$0xff] %v1429
        %1462 = vst [vmem:[%s357 + $0xd8] sm:$0xff] %v1430
        %1463 = vst [vmem:[%s357 + $0xe0] sm:$0xff] %v1431
        %1464 = vst [vmem:[%s357 + $0xe8] sm:$0xff] %v1432
        %1465 = vst [vmem:[%s357 + $0xf0] sm:$0xff] %v1433
        %1466 = vst [vmem:[%s357 + $0xf8] sm:$0xff] %v1434
        %s1467 = sand.u32 %s190, 1
        %s1468 = scalar_lea.sflag [#allocation5], %s1467
        %s1469 = sand.u32 %s190, 1
        %s1470 = smul.addr %s1469, 256
        %s1471 = scalar_lea.vmem [#allocation9], %s1470
        %s1472 = sand.u32 %s216, 1
        %s1473 = scalar_lea.sflag [#allocation11], %s1472
        %s1474 = sand.u32 %s216, 1
        %s1475 = smul.addr %s1474, 256
        %s1476 = scalar_lea.vmem [#allocation10], %s1475
        // Predicated region
        $region61: #{tpu_custom_call.1} parent=47 // pred_check
          %p1477 = pneg %p200
        $region62: #{tpu_custom_call.1} parent=47 // pred_check_branch
          %1479 = sbr.rel (%p1477) target = $region64
        $region63: #{tpu_custom_call.1} parent=47 // pred_region
          %s1480 = smul.u32 2, %s30
          %s1482 = ssub.s32 4096, 4096
          %1483 = vsyncadd %s1468, %s1482
          %s1484 = smul.addr %s1480, 16
          %s1485 = smul.addr %s1484, 128
          %s1486 = scalar_lea.hbm %s7, %s1485
          %s1487 = sshll.u32 %s1471, 4
          %s1488 = int_to_ptr.vmem [resolvable:$true] %s1487
          %1493 = dma.vmem_to_hbm [thread:$0]  %s1488, 4096, %s1486, %s1468, 128, 128, 8
        $region64: #{tpu_custom_call.1} parent=47 // pred_fallthru
          _
        // Predicated region
        $region65: #{tpu_custom_call.1} parent=47 // pred_check
          %p1494 = pneg %p226
        $region66: #{tpu_custom_call.1} parent=47 // pred_check_branch
          %1496 = sbr.rel (%p1494) target = $region68
        $region67: #{tpu_custom_call.1} parent=47 // pred_region
          %s1497 = smul.u32 2, %s30
          %s1499 = ssub.s32 4096, 4096
          %1500 = vsyncadd %s1473, %s1499
          %s1501 = smul.addr %s1497, 16
          %s1502 = smul.addr %s1501, 128
          %s1503 = scalar_lea.hbm %s8, %s1502
          %s1504 = sshll.u32 %s1476, 4
          %s1505 = int_to_ptr.vmem [resolvable:$true] %s1504
          %1510 = dma.vmem_to_hbm [thread:$0]  %s1505, 4096, %s1503, %s1473, 128, 128, 8
        $region68: #{tpu_custom_call.1} parent=47 // pred_fallthru
          _
      $region48: #{tpu_custom_call.1} parent=5 // pred_fallthru
        _
      %p1511 = scmp.le.s32.totalorder 2, %s25
      // Predicated region
      $region69: #{tpu_custom_call.1} parent=5 // pred_check
        %p1512 = pneg %p1511
      $region70: #{tpu_custom_call.1} parent=5 // pred_check_branch
        %1514 = sbr.rel (%p1512) target = $region72
      $region71: #{tpu_custom_call.1} parent=5 // pred_region
        %s1515 = ssub.s32 %s25, 2
        // Predicated region
        $region73: #{tpu_custom_call.1} parent=71 // pred_check
          %p1516 = pneg %p206
        $region74: #{tpu_custom_call.1} parent=71 // pred_check_branch
          %1518 = sbr.rel (%p1516) target = $region76
        $region75: #{tpu_custom_call.1} parent=71 // pred_region
          %s1519 = sand.u32 %s191, 1
          %s1520 = scalar_lea.sflag [#allocation5], %s1519
          %s1521 = sand.u32 %s191, 1
          %s1522 = smul.addr %s1521, 256
          %s1523 = scalar_lea.vmem [#allocation9], %s1522
          %1524 = dma.done %s1520, 4096
        $region76: #{tpu_custom_call.1} parent=71 // pred_fallthru
          _
        // Predicated region
        $region77: #{tpu_custom_call.1} parent=71 // pred_check
          %p1525 = pneg %p232
        $region78: #{tpu_custom_call.1} parent=71 // pred_check_branch
          %1527 = sbr.rel (%p1525) target = $region80
        $region79: #{tpu_custom_call.1} parent=71 // pred_region
          %s1528 = sand.u32 %s217, 1
          %s1529 = scalar_lea.sflag [#allocation11], %s1528
          %s1530 = sand.u32 %s217, 1
          %s1531 = smul.addr %s1530, 256
          %s1532 = scalar_lea.vmem [#allocation10], %s1531
          %1533 = dma.done %s1529, 4096
        $region80: #{tpu_custom_call.1} parent=71 // pred_fallthru
          _
      $region72: #{tpu_custom_call.1} parent=5 // pred_fallthru
        _
    $region6: #{tpu_custom_call.1} parent=1 // loop_footer
      %s29 = sadd.s32 1, %s25
    $region7: #{tpu_custom_call.1} parent=1 // loop_footer_branch
      %24 = sbr.rel target = $region3
    $region8: #{tpu_custom_call.1} parent=1 // loop_exit
      _
    %1534 = vsyncpa [#allocation4], 1
    %s1535 = scalar_lea.sflag [#allocation4], 1
    %1536 = vsyncpa %s1535, 1
    %1537 = vsyncpa [#allocation7], 1
    %1538 = vsyncpa [#allocation5], 1
    %s1539 = scalar_lea.sflag [#allocation5], 1
    %1540 = vsyncpa %s1539, 1
    %1541 = vsyncpa [#allocation11], 1
    %s1542 = scalar_lea.sflag [#allocation11], 1
    %1543 = vsyncpa %s1542, 1

</llo_original>
